<compile_context>
chip_gen: v7x
topology: tpu7x:2x2x1
jax: 0.10.0
libtpu: 0.0.40
codegen_flags: <defaults>
</compile_context>

<pallas_src>
import functools

import jax
import jax.numpy as jnp
from jax.experimental import pallas as pl
from jax.experimental.pallas import tpu as pltpu


# ---------------------------------------------------------------------------
# Pallas kernel: everything in PreLayer.forward after the graph preprocessing
# ---------------------------------------------------------------------------
def prelayer_kernel(
    x_ref,        # (in_size, BN)   bf16  input features, batch folded on lanes
    ct_ref,       # (emb, BN)       f32   cell state
    g1_ref,       # (BN, BN)        bf16  block-diag normalized laplacian #1
    g2_ref,       # (BN, BN)        bf16  block-diag normalized laplacian #2
    emb_w_ref,    # (emb, in_size)  bf16  Conv1d k=1 weight
    emb_b_ref,    # (emb, 1)        f32   Conv1d bias
    fsm_wg_ref,   # (emb, emb)      bf16  FSM gate weight
    fsm_bg_ref,   # (emb, 1)        f32
    fsm_wv_ref,   # (emb, emb)      bf16  FSM value weight
    fsm_bv_ref,   # (emb, 1)        f32
    w12_ref,      # (2*emb, emb)    bf16  [lin1_w ; lin2_w]
    w12_bd_ref,   # (2*emb, 2*emb)  bf16  block_diag(lin1_w, lin2_w)
    b12_ref,      # (2*emb, 1)      f32   [0 ; lin2_b]
    ln_g_ref,     # (emb, BN)       f32   LayerNorm weight tiled over batch
    ln_b_ref,     # (emb, BN)       f32   LayerNorm bias tiled over batch
    s_ref,        # (BN, BN)        f32   per-sample column-block indicator
    ht_ref,       # (emb, BN) out   f32
    ct_out_ref,   # (emb, BN) out   f32
    *,
    emb,            # static: emb_size
    inv_ln_count,   # static: 1.0 / (emb * N)
):
    f32 = jnp.float32
    bf16 = jnp.bfloat16

    # x = F.leaky_relu(self.emb(x))             (Conv1d kernel_size=1)
    h = jnp.dot(emb_w_ref[...], x_ref[...], preferred_element_type=f32)
    h = h + emb_b_ref[...]
    h = jnp.where(h > 0, h, 0.01 * h)            # leaky_relu, default slope 0.01

    # x = x.permute(0,2,1); x = self.att(x) + x; x = x.permute(0,2,1)
    # TODO(synk): FSM module definition not provided in the source file;
    # implemented as a gated linear feature-selection unit
    #   FSM(x) = sigmoid(x @ Wg^T + bg) * (x @ Wv^T + bv)
    # computed directly in channel-major layout (no transposes, since
    # (x @ Wg^T)^T == Wg @ h).
    hb = h.astype(bf16)
    gate = jax.nn.sigmoid(
        jnp.dot(fsm_wg_ref[...], hb, preferred_element_type=f32) + fsm_bg_ref[...])
    val = jnp.dot(fsm_wv_ref[...], hb, preferred_element_type=f32) + fsm_bv_ref[...]
    x = gate * val + h                           # (emb, BN)  post-FSM residual

    # Fused lin1/lin2 graph chain (dropout == identity in eval):
    #   rows [0, emb)      = lin1(lin1(x) @ G1) @ G2
    #   rows [emb, 2*emb)  = lin2(lin2(x) @ G1) @ G2
    t = jnp.dot(w12_ref[...], x.astype(bf16), preferred_element_type=f32) + b12_ref[...]
    t = jnp.dot(t.astype(bf16), g1_ref[...], preferred_element_type=f32)
    t = jnp.dot(w12_bd_ref[...], t.astype(bf16), preferred_element_type=f32) + b12_ref[...]
    t = jnp.dot(t.astype(bf16), g2_ref[...], preferred_element_type=f32)   # (2*emb, BN)

    ln_g = ln_g_ref[...]
    ln_b = ln_b_ref[...]
    s = s_ref[...]

    def layernorm(y):
        # nn.LayerNorm([emb, N]): per-sample stats over (emb, N).  With the
        # batch folded onto lanes, the per-sample sums are a sublane reduce
        # plus a matmul against the block indicator S.  Single data pass:
        # var = E[y^2] - E[y]^2.
        tot = jnp.sum(jnp.dot(y, s, preferred_element_type=f32),
                      axis=0, keepdims=True)
        tot_sq = jnp.sum(jnp.dot(y * y, s, preferred_element_type=f32),
                         axis=0, keepdims=True)
        mu = tot * inv_ln_count
        var = tot_sq * inv_ln_count - mu * mu
        return (y - mu) * jax.lax.rsqrt(var + 1e-5) * ln_g + ln_b

    x_new = layernorm(t[:emb, :])                # lin1 branch
    u = layernorm(t[emb:, :])                    # lin2 branch
    # exact (erf-based) GELU, matching F.gelu default
    ft = 0.5 * u * (1.0 + jax.lax.erf(u * 0.7071067811865476))
    rt = ft      # identical weights/branch + dropout disabled -> rt == ft

    # ct = ft*ct + x_new - ft*x_new   ==   ft*(ct - x_new) + x_new
    ct = ct_ref[...]
    ct_new = ft * (ct - x_new) + x_new
    # ht = rt*elu(ct) + x - rt*x      ==   rt*(elu(ct) - x) + x    (elu alpha=1)
    elu_ct = jnp.where(ct_new > 0, ct_new, jnp.exp(ct_new) - 1.0)
    ht = rt * (elu_ct - x) + x

    ht_ref[...] = ht.astype(ht_ref.dtype)
    ct_out_ref[...] = ct_new.astype(ct_out_ref.dtype)


# ---------------------------------------------------------------------------
# Glue: graph laplacian preprocessing (one-time, tiny) + pallas_call wrapper
# ---------------------------------------------------------------------------
def calculate_laplacian_with_self_loop(matrix):
    row_sum = matrix.sum(1)
    d_inv_sqrt = row_sum ** -0.5
    d_inv_sqrt = jnp.where(jnp.isinf(d_inv_sqrt), 0.0, d_inv_sqrt)
    d_mat = jnp.diag(d_inv_sqrt)
    return (matrix @ d_mat).T @ d_mat


@functools.partial(jax.jit, static_argnames=("batch_block",))
def prelayer_forward(x, ct, graph_data, params, *, batch_block=None):
    B, in_size, N = x.shape
    emb = params["emb_w"].shape[0]

    # One grid step processes `batch_block` samples (lane width batch_block*N).
    # Default: whole batch in one step (no per-step overhead, widest output).
    # On v7x with a large batch, set batch_block = B // 2 so the parallel grid
    # axis shards across the two TensorCores (sub-blocks must stay lane-dense).
    if batch_block is None:
        batch_block = B
    assert B % batch_block == 0
    nblk = B // batch_block
    BN = batch_block * N
    assert nblk == 1 or BN % 128 == 0, "sub-batch blocks must be lane-dense"

    f32, bf16 = jnp.float32, jnp.bfloat16

    # One-time graph preprocessing (plain JAX glue).
    eye = jnp.eye(N, dtype=f32)
    g1 = calculate_laplacian_with_self_loop(graph_data[0].astype(f32) + eye)
    g2 = calculate_laplacian_with_self_loop(graph_data[1].astype(f32) + eye)
    # Block-diagonal over the batch block: per-sample (N, N) contraction
    # becomes one lane-dense (2*emb, BN) @ (BN, BN) matmul.
    eye_bb = jnp.eye(batch_block, dtype=f32)
    g1_bd = jnp.kron(eye_bb, g1).astype(bf16)
    g2_bd = jnp.kron(eye_bb, g2).astype(bf16)
    # Per-sample column-block indicator for LayerNorm statistics.
    s_blk = jnp.kron(eye_bb, jnp.ones((N, N), f32))

    # Channel-major layout, batch folded onto the lane axis (col = b*N + n).
    x_wide = jnp.transpose(x, (1, 0, 2)).reshape(in_size, B * N).astype(bf16)
    ct_wide = jnp.transpose(ct, (1, 0, 2)).reshape(emb, B * N).astype(f32)

    # Weights: cast to bf16 once, outside the kernel.
    emb_w = params["emb_w"].astype(bf16)
    fsm_wg = params["fsm_wg"].astype(bf16)
    fsm_wv = params["fsm_wv"].astype(bf16)
    lin1_w = params["lin1_w"].astype(f32)
    lin2_w = params["lin2_w"].astype(f32)
    w12 = jnp.concatenate([lin1_w, lin2_w], axis=0).astype(bf16)
    zeros_ee = jnp.zeros((emb, emb), f32)
    w12_bd = jnp.concatenate(
        [jnp.concatenate([lin1_w, zeros_ee], axis=1),
         jnp.concatenate([zeros_ee, lin2_w], axis=1)], axis=0).astype(bf16)
    b12 = jnp.concatenate(
        [jnp.zeros((emb, 1), f32), params["lin2_b"].astype(f32)], axis=0)
    ln_g_wide = jnp.tile(params["ln_g"].astype(f32), (1, batch_block))
    ln_b_wide = jnp.tile(params["ln_b"].astype(f32), (1, batch_block))

    blk = lambda i: (0, i)     # batch-block along the lane axis
    rep = lambda i: (0, 0)     # shared / grid-invariant

    in_specs = [
        pl.BlockSpec((in_size, BN), blk),          # x
        pl.BlockSpec((emb, BN), blk),              # ct
        pl.BlockSpec((BN, BN), rep),               # g1 (block-diag)
        pl.BlockSpec((BN, BN), rep),               # g2 (block-diag)
        pl.BlockSpec((emb, in_size), rep),         # emb_w
        pl.BlockSpec((emb, 1), rep),               # emb_b
        pl.BlockSpec((emb, emb), rep),             # fsm_wg
        pl.BlockSpec((emb, 1), rep),               # fsm_bg
        pl.BlockSpec((emb, emb), rep),             # fsm_wv
        pl.BlockSpec((emb, 1), rep),               # fsm_bv
        pl.BlockSpec((2 * emb, emb), rep),         # w12
        pl.BlockSpec((2 * emb, 2 * emb), rep),     # w12_bd
        pl.BlockSpec((2 * emb, 1), rep),           # b12
        pl.BlockSpec((emb, BN), rep),              # ln_g (tiled)
        pl.BlockSpec((emb, BN), rep),              # ln_b (tiled)
        pl.BlockSpec((BN, BN), rep),               # S
    ]
    out_specs = (
        pl.BlockSpec((emb, BN), blk),
        pl.BlockSpec((emb, BN), blk),
    )
    out_shape = (
        jax.ShapeDtypeStruct((emb, B * N), f32),
        jax.ShapeDtypeStruct((emb, B * N), f32),
    )

    args = (x_wide, ct_wide, g1_bd, g2_bd,
            emb_w, params["emb_b"].astype(f32),
            fsm_wg, params["fsm_bg"].astype(f32),
            fsm_wv, params["fsm_bv"].astype(f32),
            w12, w12_bd, b12, ln_g_wide, ln_b_wide, s_blk)

    # Advisory cost estimate so XLA schedules surrounding ops sensibly.
    bn_tot = B * N
    flops = 2 * bn_tot * (
        emb * in_size           # emb conv
        + 2 * emb * emb         # FSM gate + value
        + 2 * emb * emb         # stacked lin (first)
        + 2 * emb * BN          # @ G1 (block-diag)
        + 2 * emb * 2 * emb     # stacked lin (second, block-diag)
        + 2 * emb * BN          # @ G2
        + 4 * emb * BN          # LayerNorm stat matmuls (2 branches x 2)
    )
    transcendentals = 4 * emb * bn_tot          # sigmoid + erf + exp (+ rsqrt)
    bytes_accessed = (sum(int(a.size) * a.dtype.itemsize for a in args)
                      + 2 * emb * bn_tot * 4)

    kernel = functools.partial(
        prelayer_kernel, emb=emb, inv_ln_count=1.0 / (emb * N))

    ht_wide, ct_out_wide = pl.pallas_call(
        kernel,
        grid=(nblk,),
        in_specs=in_specs,
        out_specs=out_specs,
        out_shape=out_shape,
        compiler_params=pltpu.CompilerParams(
            dimension_semantics=("parallel",)),
        cost_estimate=pl.CostEstimate(
            flops=int(flops),
            transcendentals=int(transcendentals),
            bytes_accessed=int(bytes_accessed)),
    )(*args)

    # Back to the PyTorch NCL layout (B, emb, N).
    ht = jnp.transpose(ht_wide.reshape(emb, B, N), (1, 0, 2))
    ct_out = jnp.transpose(ct_out_wide.reshape(emb, B, N), (1, 0, 2))
    return ht, ct_out


def init_params(key, num_id, in_size, emb_size):
    ks = jax.random.split(key, 8)
    f32 = jnp.float32
    s_in = 1.0 / jnp.sqrt(in_size)
    s_e = 1.0 / jnp.sqrt(emb_size)
    return {
        "emb_w": jax.random.uniform(ks[0], (emb_size, in_size), f32, -s_in, s_in),
        "emb_b": jax.random.uniform(ks[1], (emb_size, 1), f32, -s_in, s_in),
        "fsm_wg": jax.random.uniform(ks[2], (emb_size, emb_size), f32, -s_e, s_e),
        "fsm_bg": jnp.zeros((emb_size, 1), f32),
        "fsm_wv": jax.random.uniform(ks[3], (emb_size, emb_size), f32, -s_e, s_e),
        "fsm_bv": jnp.zeros((emb_size, 1), f32),
        "lin1_w": jax.random.uniform(ks[4], (emb_size, emb_size), f32, -s_e, s_e),
        "lin2_w": jax.random.uniform(ks[5], (emb_size, emb_size), f32, -s_e, s_e),
        "lin2_b": jax.random.uniform(ks[6], (emb_size, 1), f32, -s_e, s_e),
        "ln_g": jnp.ones((emb_size, num_id), f32),
        "ln_b": jnp.zeros((emb_size, num_id), f32),
    }


if __name__ == "__main__":
    # Shapes consistent with the module:
    #   x:  (batch, in_size, num_id)   -- Conv1d NCL input
    #   ct: (batch, emb_size, num_id)  -- cell state
    #   graph_data: (2, num_id, num_id)
    B, in_size, emb_size, num_id = 2, 4, 32, 16

    key = jax.random.PRNGKey(0)
    k_x, k_ct, k_g, k_p = jax.random.split(key, 4)

    x = jax.random.normal(k_x, (B, in_size, num_id), jnp.float32)
    ct = jax.random.normal(k_ct, (B, emb_size, num_id), jnp.float32)
    graph_data = jax.random.uniform(k_g, (2, num_id, num_id), jnp.float32)

    params = init_params(k_p, num_id, in_size, emb_size)

    ht, ct_out = prelayer_forward(x, ct, graph_data, params)
    jax.block_until_ready((ht, ct_out))

    assert ht.shape == (B, emb_size, num_id)
    assert ct_out.shape == (B, emb_size, num_id)
    assert jnp.all(jnp.isfinite(ht)) and jnp.all(jnp.isfinite(ct_out))
    print("KERNEL_OK")
</pallas_src>

<mosaic_0001>
module attributes {stable_mosaic.version = 11 : i64} {
  func.func @prelayer_kernel(%arg0: i32, %arg1: memref<4x32xbf16, #tpu.memory_space<vmem>>, %arg2: memref<32x32xf32, #tpu.memory_space<vmem>>, %arg3: memref<32x32xbf16, #tpu.memory_space<vmem>>, %arg4: memref<32x32xbf16, #tpu.memory_space<vmem>>, %arg5: memref<32x4xbf16, #tpu.memory_space<vmem>>, %arg6: memref<32x1xf32, #tpu.memory_space<vmem>>, %arg7: memref<32x32xbf16, #tpu.memory_space<vmem>>, %arg8: memref<32x1xf32, #tpu.memory_space<vmem>>, %arg9: memref<32x32xbf16, #tpu.memory_space<vmem>>, %arg10: memref<32x1xf32, #tpu.memory_space<vmem>>, %arg11: memref<64x32xbf16, #tpu.memory_space<vmem>>, %arg12: memref<64x64xbf16, #tpu.memory_space<vmem>>, %arg13: memref<64x1xf32, #tpu.memory_space<vmem>>, %arg14: memref<32x32xf32, #tpu.memory_space<vmem>>, %arg15: memref<32x32xf32, #tpu.memory_space<vmem>>, %arg16: memref<32x32xf32, #tpu.memory_space<vmem>>, %arg17: memref<32x32xf32, #tpu.memory_space<vmem>>, %arg18: memref<32x32xf32, #tpu.memory_space<vmem>>) attributes {dimension_semantics = [#tpu.dimension_semantics<parallel>], iteration_bounds = array<i64: 1>, scalar_prefetch = 0 : i64, scratch_operands = 0 : i64, tpu.core_type = #tpu.core_type<tc>, window_params = [{transform_indices = @transform_0, window_bounds = array<i64: 4, 32>}, {transform_indices = @transform_1, window_bounds = array<i64: 32, 32>}, {pipeline_mode = #tpu.pipeline_mode<synchronous>, transform_indices = @transform_2, window_bounds = array<i64: 32, 32>}, {pipeline_mode = #tpu.pipeline_mode<synchronous>, transform_indices = @transform_3, window_bounds = array<i64: 32, 32>}, {pipeline_mode = #tpu.pipeline_mode<synchronous>, transform_indices = @transform_4, window_bounds = array<i64: 32, 4>}, {pipeline_mode = #tpu.pipeline_mode<synchronous>, transform_indices = @transform_5, window_bounds = array<i64: 32, 1>}, {pipeline_mode = #tpu.pipeline_mode<synchronous>, transform_indices = @transform_6, window_bounds = array<i64: 32, 32>}, {pipeline_mode = #tpu.pipeline_mode<synchronous>, transform_indices = @transform_7, window_bounds = array<i64: 32, 1>}, {pipeline_mode = #tpu.pipeline_mode<synchronous>, transform_indices = @transform_8, window_bounds = array<i64: 32, 32>}, {pipeline_mode = #tpu.pipeline_mode<synchronous>, transform_indices = @transform_9, window_bounds = array<i64: 32, 1>}, {pipeline_mode = #tpu.pipeline_mode<synchronous>, transform_indices = @transform_10, window_bounds = array<i64: 64, 32>}, {pipeline_mode = #tpu.pipeline_mode<synchronous>, transform_indices = @transform_11, window_bounds = array<i64: 64, 64>}, {pipeline_mode = #tpu.pipeline_mode<synchronous>, transform_indices = @transform_12, window_bounds = array<i64: 64, 1>}, {pipeline_mode = #tpu.pipeline_mode<synchronous>, transform_indices = @transform_13, window_bounds = array<i64: 32, 32>}, {pipeline_mode = #tpu.pipeline_mode<synchronous>, transform_indices = @transform_14, window_bounds = array<i64: 32, 32>}, {pipeline_mode = #tpu.pipeline_mode<synchronous>, transform_indices = @transform_15, window_bounds = array<i64: 32, 32>}, {transform_indices = @transform_16, window_bounds = array<i64: 32, 32>}, {transform_indices = @transform_17, window_bounds = array<i64: 32, 32>}]} {
    %c0 = arith.constant 0 : index
    %c0_0 = arith.constant 0 : index
    %0 = vector.load %arg5[%c0, %c0_0] : memref<32x4xbf16, #tpu.memory_space<vmem>>, vector<32x4xbf16>
    %c0_1 = arith.constant 0 : index
    %c0_2 = arith.constant 0 : index
    %1 = vector.load %arg1[%c0_1, %c0_2] : memref<4x32xbf16, #tpu.memory_space<vmem>>, vector<4x32xbf16>
    %cst = arith.constant dense<0.000000e+00> : vector<32x32xf32>
    %2 = tpu.matmul %0, %1, %cst {dimension_numbers = #tpu.dot_dimension_numbers<[1], [0], [0], [1], [0, 0, 1, 1], [], []>} : vector<32x4xbf16>, vector<4x32xbf16>, vector<32x32xf32> -> vector<32x32xf32>
    %c0_3 = arith.constant 0 : index
    %c0_4 = arith.constant 0 : index
    %3 = vector.load %arg6[%c0_3, %c0_4] : memref<32x1xf32, #tpu.memory_space<vmem>>, vector<32x1xf32>
    %4 = vector.broadcast %3 : vector<32x1xf32> to vector<32x32xf32>
    %5 = arith.addf %2, %4 : vector<32x32xf32>
    %cst_5 = arith.constant 0.000000e+00 : f32
    %6 = vector.broadcast %cst_5 : f32 to vector<32x32xf32>
    %7 = arith.cmpf ogt, %5, %6 : vector<32x32xf32>
    %cst_6 = arith.constant 0.00999999977 : f32
    %8 = vector.broadcast %cst_6 : f32 to vector<32x32xf32>
    %9 = arith.mulf %8, %5 : vector<32x32xf32>
    %10 = arith.select %7, %5, %9 : vector<32x32xi1>, vector<32x32xf32>
    %11 = arith.truncf %10 : vector<32x32xf32> to vector<32x32xbf16>
    %c0_7 = arith.constant 0 : index
    %c0_8 = arith.constant 0 : index
    %12 = vector.load %arg7[%c0_7, %c0_8] : memref<32x32xbf16, #tpu.memory_space<vmem>>, vector<32x32xbf16>
    %cst_9 = arith.constant dense<0.000000e+00> : vector<32x32xf32>
    %13 = tpu.matmul %12, %11, %cst_9 {dimension_numbers = #tpu.dot_dimension_numbers<[1], [0], [0], [1], [0, 0, 1, 1], [], []>} : vector<32x32xbf16>, vector<32x32xbf16>, vector<32x32xf32> -> vector<32x32xf32>
    %c0_10 = arith.constant 0 : index
    %c0_11 = arith.constant 0 : index
    %14 = vector.load %arg8[%c0_10, %c0_11] : memref<32x1xf32, #tpu.memory_space<vmem>>, vector<32x1xf32>
    %15 = vector.broadcast %14 : vector<32x1xf32> to vector<32x32xf32>
    %16 = arith.addf %13, %15 : vector<32x32xf32>
    %17 = arith.negf %16 : vector<32x32xf32>
    %18 = math.exp %17 : vector<32x32xf32>
    %cst_12 = arith.constant 1.000000e+00 : f32
    %19 = vector.broadcast %cst_12 : f32 to vector<32x32xf32>
    %20 = arith.addf %19, %18 : vector<32x32xf32>
    %21 = arith.divf %19, %20 : vector<32x32xf32>
    %c0_13 = arith.constant 0 : index
    %c0_14 = arith.constant 0 : index
    %22 = vector.load %arg9[%c0_13, %c0_14] : memref<32x32xbf16, #tpu.memory_space<vmem>>, vector<32x32xbf16>
    %cst_15 = arith.constant dense<0.000000e+00> : vector<32x32xf32>
    %23 = tpu.matmul %22, %11, %cst_15 {dimension_numbers = #tpu.dot_dimension_numbers<[1], [0], [0], [1], [0, 0, 1, 1], [], []>} : vector<32x32xbf16>, vector<32x32xbf16>, vector<32x32xf32> -> vector<32x32xf32>
    %c0_16 = arith.constant 0 : index
    %c0_17 = arith.constant 0 : index
    %24 = vector.load %arg10[%c0_16, %c0_17] : memref<32x1xf32, #tpu.memory_space<vmem>>, vector<32x1xf32>
    %25 = vector.broadcast %24 : vector<32x1xf32> to vector<32x32xf32>
    %26 = arith.addf %23, %25 : vector<32x32xf32>
    %27 = arith.mulf %21, %26 : vector<32x32xf32>
    %28 = arith.addf %27, %10 : vector<32x32xf32>
    %c0_18 = arith.constant 0 : index
    %c0_19 = arith.constant 0 : index
    %29 = vector.load %arg11[%c0_18, %c0_19] : memref<64x32xbf16, #tpu.memory_space<vmem>>, vector<64x32xbf16>
    %30 = arith.truncf %28 : vector<32x32xf32> to vector<32x32xbf16>
    %cst_20 = arith.constant dense<0.000000e+00> : vector<64x32xf32>
    %31 = tpu.matmul %29, %30, %cst_20 {dimension_numbers = #tpu.dot_dimension_numbers<[1], [0], [0], [1], [0, 0, 1, 1], [], []>} : vector<64x32xbf16>, vector<32x32xbf16>, vector<64x32xf32> -> vector<64x32xf32>
    %c0_21 = arith.constant 0 : index
    %c0_22 = arith.constant 0 : index
    %32 = vector.load %arg13[%c0_21, %c0_22] : memref<64x1xf32, #tpu.memory_space<vmem>>, vector<64x1xf32>
    %33 = vector.broadcast %32 : vector<64x1xf32> to vector<64x32xf32>
    %34 = arith.addf %31, %33 : vector<64x32xf32>
    %35 = arith.truncf %34 : vector<64x32xf32> to vector<64x32xbf16>
    %c0_23 = arith.constant 0 : index
    %c0_24 = arith.constant 0 : index
    %36 = vector.load %arg3[%c0_23, %c0_24] : memref<32x32xbf16, #tpu.memory_space<vmem>>, vector<32x32xbf16>
    %cst_25 = arith.constant dense<0.000000e+00> : vector<64x32xf32>
    %37 = tpu.matmul %35, %36, %cst_25 {dimension_numbers = #tpu.dot_dimension_numbers<[1], [0], [0], [1], [0, 0, 1, 1], [], []>} : vector<64x32xbf16>, vector<32x32xbf16>, vector<64x32xf32> -> vector<64x32xf32>
    %c0_26 = arith.constant 0 : index
    %c0_27 = arith.constant 0 : index
    %38 = vector.load %arg12[%c0_26, %c0_27] : memref<64x64xbf16, #tpu.memory_space<vmem>>, vector<64x64xbf16>
    %39 = arith.truncf %37 : vector<64x32xf32> to vector<64x32xbf16>
    %cst_28 = arith.constant dense<0.000000e+00> : vector<64x32xf32>
    %40 = tpu.matmul %38, %39, %cst_28 {dimension_numbers = #tpu.dot_dimension_numbers<[1], [0], [0], [1], [0, 0, 1, 1], [], []>} : vector<64x64xbf16>, vector<64x32xbf16>, vector<64x32xf32> -> vector<64x32xf32>
    %c0_29 = arith.constant 0 : index
    %c0_30 = arith.constant 0 : index
    %41 = vector.load %arg13[%c0_29, %c0_30] : memref<64x1xf32, #tpu.memory_space<vmem>>, vector<64x1xf32>
    %42 = vector.broadcast %41 : vector<64x1xf32> to vector<64x32xf32>
    %43 = arith.addf %40, %42 : vector<64x32xf32>
    %44 = arith.truncf %43 : vector<64x32xf32> to vector<64x32xbf16>
    %c0_31 = arith.constant 0 : index
    %c0_32 = arith.constant 0 : index
    %45 = vector.load %arg4[%c0_31, %c0_32] : memref<32x32xbf16, #tpu.memory_space<vmem>>, vector<32x32xbf16>
    %cst_33 = arith.constant dense<0.000000e+00> : vector<64x32xf32>
    %46 = tpu.matmul %44, %45, %cst_33 {dimension_numbers = #tpu.dot_dimension_numbers<[1], [0], [0], [1], [0, 0, 1, 1], [], []>} : vector<64x32xbf16>, vector<32x32xbf16>, vector<64x32xf32> -> vector<64x32xf32>
    %c0_34 = arith.constant 0 : index
    %c0_35 = arith.constant 0 : index
    %47 = vector.load %arg14[%c0_34, %c0_35] : memref<32x32xf32, #tpu.memory_space<vmem>>, vector<32x32xf32>
    %c0_36 = arith.constant 0 : index
    %c0_37 = arith.constant 0 : index
    %48 = vector.load %arg15[%c0_36, %c0_37] : memref<32x32xf32, #tpu.memory_space<vmem>>, vector<32x32xf32>
    %c0_38 = arith.constant 0 : index
    %c0_39 = arith.constant 0 : index
    %49 = vector.load %arg16[%c0_38, %c0_39] : memref<32x32xf32, #tpu.memory_space<vmem>>, vector<32x32xf32>
    %50 = vector.extract_strided_slice %46 {offsets = [0, 0], sizes = [32, 32], strides = [1, 1]} : vector<64x32xf32> to vector<32x32xf32>
    %cst_40 = arith.constant dense<0.000000e+00> : vector<32x32xf32>
    %51 = tpu.matmul %50, %49, %cst_40 {dimension_numbers = #tpu.dot_dimension_numbers<[1], [0], [0], [1], [0, 0, 1, 1], [], []>} : vector<32x32xf32>, vector<32x32xf32>, vector<32x32xf32> -> vector<32x32xf32>
    %cst_41 = arith.constant dense<0.000000e+00> : vector<32xf32>
    %52 = vector.multi_reduction <add>, %51, %cst_41 [0] : vector<32x32xf32> to vector<32xf32>
    %53 = vector.shape_cast %52 : vector<32xf32> to vector<1x32xf32>
    %54 = arith.mulf %50, %50 : vector<32x32xf32>
    %cst_42 = arith.constant dense<0.000000e+00> : vector<32x32xf32>
    %55 = tpu.matmul %54, %49, %cst_42 {dimension_numbers = #tpu.dot_dimension_numbers<[1], [0], [0], [1], [0, 0, 1, 1], [], []>} : vector<32x32xf32>, vector<32x32xf32>, vector<32x32xf32> -> vector<32x32xf32>
    %cst_43 = arith.constant dense<0.000000e+00> : vector<32xf32>
    %56 = vector.multi_reduction <add>, %55, %cst_43 [0] : vector<32x32xf32> to vector<32xf32>
    %57 = vector.shape_cast %56 : vector<32xf32> to vector<1x32xf32>
    %cst_44 = arith.constant 0.001953125 : f32
    %58 = vector.broadcast %cst_44 : f32 to vector<1x32xf32>
    %59 = arith.mulf %53, %58 : vector<1x32xf32>
    %cst_45 = arith.constant 0.001953125 : f32
    %60 = vector.broadcast %cst_45 : f32 to vector<1x32xf32>
    %61 = arith.mulf %57, %60 : vector<1x32xf32>
    %62 = arith.mulf %59, %59 : vector<1x32xf32>
    %63 = arith.subf %61, %62 : vector<1x32xf32>
    %64 = vector.broadcast %59 : vector<1x32xf32> to vector<32x32xf32>
    %65 = arith.subf %50, %64 : vector<32x32xf32>
    %cst_46 = arith.constant 9.99999974E-6 : f32
    %66 = vector.broadcast %cst_46 : f32 to vector<1x32xf32>
    %67 = arith.addf %63, %66 : vector<1x32xf32>
    %68 = math.rsqrt %67 : vector<1x32xf32>
    %69 = vector.broadcast %68 : vector<1x32xf32> to vector<32x32xf32>
    %70 = arith.mulf %65, %69 : vector<32x32xf32>
    %71 = arith.mulf %70, %47 : vector<32x32xf32>
    %72 = arith.addf %71, %48 : vector<32x32xf32>
    %73 = vector.extract_strided_slice %46 {offsets = [32, 0], sizes = [32, 32], strides = [1, 1]} : vector<64x32xf32> to vector<32x32xf32>
    %cst_47 = arith.constant dense<0.000000e+00> : vector<32x32xf32>
    %74 = tpu.matmul %73, %49, %cst_47 {dimension_numbers = #tpu.dot_dimension_numbers<[1], [0], [0], [1], [0, 0, 1, 1], [], []>} : vector<32x32xf32>, vector<32x32xf32>, vector<32x32xf32> -> vector<32x32xf32>
    %cst_48 = arith.constant dense<0.000000e+00> : vector<32xf32>
    %75 = vector.multi_reduction <add>, %74, %cst_48 [0] : vector<32x32xf32> to vector<32xf32>
    %76 = vector.shape_cast %75 : vector<32xf32> to vector<1x32xf32>
    %77 = arith.mulf %73, %73 : vector<32x32xf32>
    %cst_49 = arith.constant dense<0.000000e+00> : vector<32x32xf32>
    %78 = tpu.matmul %77, %49, %cst_49 {dimension_numbers = #tpu.dot_dimension_numbers<[1], [0], [0], [1], [0, 0, 1, 1], [], []>} : vector<32x32xf32>, vector<32x32xf32>, vector<32x32xf32> -> vector<32x32xf32>
    %cst_50 = arith.constant dense<0.000000e+00> : vector<32xf32>
    %79 = vector.multi_reduction <add>, %78, %cst_50 [0] : vector<32x32xf32> to vector<32xf32>
    %80 = vector.shape_cast %79 : vector<32xf32> to vector<1x32xf32>
    %cst_51 = arith.constant 0.001953125 : f32
    %81 = vector.broadcast %cst_51 : f32 to vector<1x32xf32>
    %82 = arith.mulf %76, %81 : vector<1x32xf32>
    %cst_52 = arith.constant 0.001953125 : f32
    %83 = vector.broadcast %cst_52 : f32 to vector<1x32xf32>
    %84 = arith.mulf %80, %83 : vector<1x32xf32>
    %85 = arith.mulf %82, %82 : vector<1x32xf32>
    %86 = arith.subf %84, %85 : vector<1x32xf32>
    %87 = vector.broadcast %82 : vector<1x32xf32> to vector<32x32xf32>
    %88 = arith.subf %73, %87 : vector<32x32xf32>
    %cst_53 = arith.constant 9.99999974E-6 : f32
    %89 = vector.broadcast %cst_53 : f32 to vector<1x32xf32>
    %90 = arith.addf %86, %89 : vector<1x32xf32>
    %91 = math.rsqrt %90 : vector<1x32xf32>
    %92 = vector.broadcast %91 : vector<1x32xf32> to vector<32x32xf32>
    %93 = arith.mulf %88, %92 : vector<32x32xf32>
    %94 = arith.mulf %93, %47 : vector<32x32xf32>
    %95 = arith.addf %94, %48 : vector<32x32xf32>
    %cst_54 = arith.constant 5.000000e-01 : f32
    %96 = vector.broadcast %cst_54 : f32 to vector<32x32xf32>
    %97 = arith.mulf %96, %95 : vector<32x32xf32>
    %cst_55 = arith.constant 0.707106769 : f32
    %98 = vector.broadcast %cst_55 : f32 to vector<32x32xf32>
    %99 = arith.mulf %95, %98 : vector<32x32xf32>
    %100 = math.erf %99 : vector<32x32xf32>
    %cst_56 = arith.constant 1.000000e+00 : f32
    %101 = vector.broadcast %cst_56 : f32 to vector<32x32xf32>
    %102 = arith.addf %101, %100 : vector<32x32xf32>
    %103 = arith.mulf %97, %102 : vector<32x32xf32>
    %c0_57 = arith.constant 0 : index
    %c0_58 = arith.constant 0 : index
    %104 = vector.load %arg2[%c0_57, %c0_58] : memref<32x32xf32, #tpu.memory_space<vmem>>, vector<32x32xf32>
    %105 = arith.subf %104, %72 : vector<32x32xf32>
    %106 = arith.mulf %103, %105 : vector<32x32xf32>
    %107 = arith.addf %106, %72 : vector<32x32xf32>
    %cst_59 = arith.constant 0.000000e+00 : f32
    %108 = vector.broadcast %cst_59 : f32 to vector<32x32xf32>
    %109 = arith.cmpf ogt, %107, %108 : vector<32x32xf32>
    %110 = math.exp %107 : vector<32x32xf32>
    %cst_60 = arith.constant 1.000000e+00 : f32
    %111 = vector.broadcast %cst_60 : f32 to vector<32x32xf32>
    %112 = arith.subf %110, %111 : vector<32x32xf32>
    %113 = arith.select %109, %107, %112 : vector<32x32xi1>, vector<32x32xf32>
    %114 = arith.subf %113, %28 : vector<32x32xf32>
    %115 = arith.mulf %103, %114 : vector<32x32xf32>
    %116 = arith.addf %115, %28 : vector<32x32xf32>
    %c0_61 = arith.constant 0 : index
    %c0_62 = arith.constant 0 : index
    %117 = vector.load %arg17[%c0_61, %c0_62] : memref<32x32xf32, #tpu.memory_space<vmem>>, vector<32x32xf32>
    tpu.vector_store %arg17[%c0_61, %c0_62], %116 {strides = array<i32>} : memref<32x32xf32, #tpu.memory_space<vmem>>, vector<32x32xf32>,
    %c0_63 = arith.constant 0 : index
    %c0_64 = arith.constant 0 : index
    %118 = vector.load %arg18[%c0_63, %c0_64] : memref<32x32xf32, #tpu.memory_space<vmem>>, vector<32x32xf32>
    tpu.vector_store %arg18[%c0_63, %c0_64], %107 {strides = array<i32>} : memref<32x32xf32, #tpu.memory_space<vmem>>, vector<32x32xf32>,
    return
  }
  func.func @transform_0(%arg0: i32) -> (i32, i32) {
    %c0_i32 = arith.constant 0 : i32
    %c0_i32_0 = arith.constant 0 : i32
    return %c0_i32, %arg0 : i32, i32
  }
  func.func @transform_1(%arg0: i32) -> (i32, i32) {
    %c0_i32 = arith.constant 0 : i32
    %c0_i32_0 = arith.constant 0 : i32
    return %c0_i32, %arg0 : i32, i32
  }
  func.func @transform_2(%arg0: i32) -> (i32, i32) {
    %c0_i32 = arith.constant 0 : i32
    %c0_i32_0 = arith.constant 0 : i32
    %c0_i32_1 = arith.constant 0 : i32
    return %c0_i32, %c0_i32_0 : i32, i32
  }
  func.func @transform_3(%arg0: i32) -> (i32, i32) {
    %c0_i32 = arith.constant 0 : i32
    %c0_i32_0 = arith.constant 0 : i32
    %c0_i32_1 = arith.constant 0 : i32
    return %c0_i32, %c0_i32_0 : i32, i32
  }
  func.func @transform_4(%arg0: i32) -> (i32, i32) {
    %c0_i32 = arith.constant 0 : i32
    %c0_i32_0 = arith.constant 0 : i32
    %c0_i32_1 = arith.constant 0 : i32
    return %c0_i32, %c0_i32_0 : i32, i32
  }
  func.func @transform_5(%arg0: i32) -> (i32, i32) {
    %c0_i32 = arith.constant 0 : i32
    %c0_i32_0 = arith.constant 0 : i32
    %c0_i32_1 = arith.constant 0 : i32
    return %c0_i32, %c0_i32_0 : i32, i32
  }
  func.func @transform_6(%arg0: i32) -> (i32, i32) {
    %c0_i32 = arith.constant 0 : i32
    %c0_i32_0 = arith.constant 0 : i32
    %c0_i32_1 = arith.constant 0 : i32
    return %c0_i32, %c0_i32_0 : i32, i32
  }
  func.func @transform_7(%arg0: i32) -> (i32, i32) {
    %c0_i32 = arith.constant 0 : i32
    %c0_i32_0 = arith.constant 0 : i32
    %c0_i32_1 = arith.constant 0 : i32
    return %c0_i32, %c0_i32_0 : i32, i32
  }
  func.func @transform_8(%arg0: i32) -> (i32, i32) {
    %c0_i32 = arith.constant 0 : i32
    %c0_i32_0 = arith.constant 0 : i32
    %c0_i32_1 = arith.constant 0 : i32
    return %c0_i32, %c0_i32_0 : i32, i32
  }
  func.func @transform_9(%arg0: i32) -> (i32, i32) {
    %c0_i32 = arith.constant 0 : i32
    %c0_i32_0 = arith.constant 0 : i32
    %c0_i32_1 = arith.constant 0 : i32
    return %c0_i32, %c0_i32_0 : i32, i32
  }
  func.func @transform_10(%arg0: i32) -> (i32, i32) {
    %c0_i32 = arith.constant 0 : i32
    %c0_i32_0 = arith.constant 0 : i32
    %c0_i32_1 = arith.constant 0 : i32
    return %c0_i32, %c0_i32_0 : i32, i32
  }
  func.func @transform_11(%arg0: i32) -> (i32, i32) {
    %c0_i32 = arith.constant 0 : i32
    %c0_i32_0 = arith.constant 0 : i32
    %c0_i32_1 = arith.constant 0 : i32
    return %c0_i32, %c0_i32_0 : i32, i32
  }
  func.func @transform_12(%arg0: i32) -> (i32, i32) {
    %c0_i32 = arith.constant 0 : i32
    %c0_i32_0 = arith.constant 0 : i32
    %c0_i32_1 = arith.constant 0 : i32
    return %c0_i32, %c0_i32_0 : i32, i32
  }
  func.func @transform_13(%arg0: i32) -> (i32, i32) {
    %c0_i32 = arith.constant 0 : i32
    %c0_i32_0 = arith.constant 0 : i32
    %c0_i32_1 = arith.constant 0 : i32
    return %c0_i32, %c0_i32_0 : i32, i32
  }
  func.func @transform_14(%arg0: i32) -> (i32, i32) {
    %c0_i32 = arith.constant 0 : i32
    %c0_i32_0 = arith.constant 0 : i32
    %c0_i32_1 = arith.constant 0 : i32
    return %c0_i32, %c0_i32_0 : i32, i32
  }
  func.func @transform_15(%arg0: i32) -> (i32, i32) {
    %c0_i32 = arith.constant 0 : i32
    %c0_i32_0 = arith.constant 0 : i32
    %c0_i32_1 = arith.constant 0 : i32
    return %c0_i32, %c0_i32_0 : i32, i32
  }
  func.func @transform_16(%arg0: i32) -> (i32, i32) {
    %c0_i32 = arith.constant 0 : i32
    %c0_i32_0 = arith.constant 0 : i32
    return %c0_i32, %arg0 : i32, i32
  }
  func.func @transform_17(%arg0: i32) -> (i32, i32) {
    %c0_i32 = arith.constant 0 : i32
    %c0_i32_0 = arith.constant 0 : i32
    return %c0_i32, %arg0 : i32, i32
  }
}

</mosaic_0001>

<llo_original>
// kernel: prelayer_forward.1
$region0: #{prelayer_forward.1}
  #allocation0 [shape = 'u32[]', space=smem, size = 0x4, offset = 0x4, fixed_abs, tag = 'smem constant byte address 0x4 - core index']
  #allocation1 [shape = 'u32[144,128]{1,0:T(1,128)}', space=vmem, size = 0x12000, scoped, tag = 'internal scratch']
  %s0 = inlined_call_operand.vmem [shape: bf16[4,32], index: 0, kind: input, shape index: {}]
  %s1 = inlined_call_operand.vmem [shape: f32[32,32], index: 1, kind: input, shape index: {}]
  %s2 = inlined_call_operand.vmem [shape: bf16[32,32], index: 2, kind: input, shape index: {}]
  %s3 = inlined_call_operand.vmem [shape: bf16[32,32], index: 3, kind: input, shape index: {}]
  %s4 = inlined_call_operand.vmem [shape: bf16[32,4], index: 4, kind: input, shape index: {}]
  %s5 = inlined_call_operand.vmem [shape: f32[32,1], index: 5, kind: input, shape index: {}]
  %s6 = inlined_call_operand.vmem [shape: bf16[32,32], index: 6, kind: input, shape index: {}]
  %s7 = inlined_call_operand.vmem [shape: f32[32,1], index: 7, kind: input, shape index: {}]
  %s8 = inlined_call_operand.vmem [shape: bf16[32,32], index: 8, kind: input, shape index: {}]
  %s9 = inlined_call_operand.vmem [shape: f32[32,1], index: 9, kind: input, shape index: {}]
  %s10 = inlined_call_operand.vmem [shape: bf16[64,32], index: 10, kind: input, shape index: {}]
  %s11 = inlined_call_operand.vmem [shape: bf16[64,64], index: 11, kind: input, shape index: {}]
  %s12 = inlined_call_operand.vmem [shape: f32[64,1], index: 12, kind: input, shape index: {}]
  %s13 = inlined_call_operand.vmem [shape: f32[32,32], index: 13, kind: input, shape index: {}]
  %s14 = inlined_call_operand.vmem [shape: f32[32,32], index: 14, kind: input, shape index: {}]
  %s15 = inlined_call_operand.vmem [shape: f32[32,32], index: 15, kind: input, shape index: {}]
  %s16 = inlined_call_operand.vmem [shape: f32[32,32], index: 16, kind: output, shape index: {0}]
  %s17 = inlined_call_operand.vmem [shape: f32[32,32], index: 17, kind: output, shape index: {1}]
  %18 = xla_tuple %s16, %s17
  %s19 = sld [smem:[#allocation0]]
  $region82: #{prelayer_forward.1} parent=0
    _
  %s21 = ssub.s32 1, %s19
  %s22 = scalar_select 0, %s21, %s19
  // Predicated region
  $region2: #{prelayer_forward.1} parent=0 // pred_check
    _
  $region3: #{prelayer_forward.1} parent=0 // pred_check_branch
    %24 = sbr.rel (0) target = $region5
  $region4: #{prelayer_forward.1} parent=0 // pred_region
    _
  $region5: #{prelayer_forward.1} parent=0 // pred_fallthru
    _
  // Predicated region
  $region6: #{prelayer_forward.1} parent=0 // pred_check
    _
  $region7: #{prelayer_forward.1} parent=0 // pred_check_branch
    %26 = sbr.rel (0) target = $region9
  $region8: #{prelayer_forward.1} parent=0 // pred_region
    _
  $region9: #{prelayer_forward.1} parent=0 // pred_fallthru
    _
  // Predicated region
  $region10: #{prelayer_forward.1} parent=0 // pred_check
    _
  $region11: #{prelayer_forward.1} parent=0 // pred_check_branch
    %28 = sbr.rel (0) target = $region13
  $region12: #{prelayer_forward.1} parent=0 // pred_region
    _
  $region13: #{prelayer_forward.1} parent=0 // pred_fallthru
    _
  // Predicated region
  $region14: #{prelayer_forward.1} parent=0 // pred_check
    _
  $region15: #{prelayer_forward.1} parent=0 // pred_check_branch
    %30 = sbr.rel (0) target = $region17
  $region16: #{prelayer_forward.1} parent=0 // pred_region
    _
  $region17: #{prelayer_forward.1} parent=0 // pred_fallthru
    _
  // Predicated region
  $region18: #{prelayer_forward.1} parent=0 // pred_check
    _
  $region19: #{prelayer_forward.1} parent=0 // pred_check_branch
    %32 = sbr.rel (0) target = $region21
  $region20: #{prelayer_forward.1} parent=0 // pred_region
    _
  $region21: #{prelayer_forward.1} parent=0 // pred_fallthru
    _
  // Predicated region
  $region22: #{prelayer_forward.1} parent=0 // pred_check
    _
  $region23: #{prelayer_forward.1} parent=0 // pred_check_branch
    %34 = sbr.rel (0) target = $region25
  $region24: #{prelayer_forward.1} parent=0 // pred_region
    _
  $region25: #{prelayer_forward.1} parent=0 // pred_fallthru
    _
  // Predicated region
  $region26: #{prelayer_forward.1} parent=0 // pred_check
    _
  $region27: #{prelayer_forward.1} parent=0 // pred_check_branch
    %36 = sbr.rel (0) target = $region29
  $region28: #{prelayer_forward.1} parent=0 // pred_region
    _
  $region29: #{prelayer_forward.1} parent=0 // pred_fallthru
    _
  // Predicated region
  $region30: #{prelayer_forward.1} parent=0 // pred_check
    _
  $region31: #{prelayer_forward.1} parent=0 // pred_check_branch
    %38 = sbr.rel (0) target = $region33
  $region32: #{prelayer_forward.1} parent=0 // pred_region
    _
  $region33: #{prelayer_forward.1} parent=0 // pred_fallthru
    _
  // Predicated region
  $region34: #{prelayer_forward.1} parent=0 // pred_check
    _
  $region35: #{prelayer_forward.1} parent=0 // pred_check_branch
    %40 = sbr.rel (0) target = $region37
  $region36: #{prelayer_forward.1} parent=0 // pred_region
    _
  $region37: #{prelayer_forward.1} parent=0 // pred_fallthru
    _
  // Predicated region
  $region38: #{prelayer_forward.1} parent=0 // pred_check
    _
  $region39: #{prelayer_forward.1} parent=0 // pred_check_branch
    %42 = sbr.rel (0) target = $region41
  $region40: #{prelayer_forward.1} parent=0 // pred_region
    _
  $region41: #{prelayer_forward.1} parent=0 // pred_fallthru
    _
  // Predicated region
  $region42: #{prelayer_forward.1} parent=0 // pred_check
    _
  $region43: #{prelayer_forward.1} parent=0 // pred_check_branch
    %44 = sbr.rel (0) target = $region45
  $region44: #{prelayer_forward.1} parent=0 // pred_region
    _
  $region45: #{prelayer_forward.1} parent=0 // pred_fallthru
    _
  // Predicated region
  $region46: #{prelayer_forward.1} parent=0 // pred_check
    _
  $region47: #{prelayer_forward.1} parent=0 // pred_check_branch
    %46 = sbr.rel (0) target = $region49
  $region48: #{prelayer_forward.1} parent=0 // pred_region
    _
  $region49: #{prelayer_forward.1} parent=0 // pred_fallthru
    _
  // Predicated region
  $region50: #{prelayer_forward.1} parent=0 // pred_check
    _
  $region51: #{prelayer_forward.1} parent=0 // pred_check_branch
    %48 = sbr.rel (0) target = $region53
  $region52: #{prelayer_forward.1} parent=0 // pred_region
    _
  $region53: #{prelayer_forward.1} parent=0 // pred_fallthru
    _
  // Predicated region
  $region54: #{prelayer_forward.1} parent=0 // pred_check
    _
  $region55: #{prelayer_forward.1} parent=0 // pred_check_branch
    %50 = sbr.rel (0) target = $region57
  $region56: #{prelayer_forward.1} parent=0 // pred_region
    _
  $region57: #{prelayer_forward.1} parent=0 // pred_fallthru
    _
  // Predicated region
  $region58: #{prelayer_forward.1} parent=0 // pred_check
    _
  $region59: #{prelayer_forward.1} parent=0 // pred_check_branch
    %52 = sbr.rel (0) target = $region61
  $region60: #{prelayer_forward.1} parent=0 // pred_region
    _
  $region61: #{prelayer_forward.1} parent=0 // pred_fallthru
    _
  // Predicated region
  $region62: #{prelayer_forward.1} parent=0 // pred_check
    _
  $region63: #{prelayer_forward.1} parent=0 // pred_check_branch
    %54 = sbr.rel (0) target = $region65
  $region64: #{prelayer_forward.1} parent=0 // pred_region
    _
  $region65: #{prelayer_forward.1} parent=0 // pred_fallthru
    _
  %v56 = vld [vmem:[%s4] sm:$0xf]
  %v57 = vld [vmem:[%s4 + $0x4] sm:$0xf]
  %v58 = vld [vmem:[%s4 + $0x8] sm:$0xf]
  %v59 = vld [vmem:[%s4 + $0xc] sm:$0xf]
  %v60 = vld [vmem:[%s0] sm:$0x3]
  %v61 = vld [vmem:[%s5] sm:$0xff]
  %v62 = vld [vmem:[%s5 + $0x8] sm:$0xff]
  %v63 = vld [vmem:[%s5 + $0x10] sm:$0xff]
  %v64 = vld [vmem:[%s5 + $0x18] sm:$0xff]
  %66 = vset.pattern.permute.xlu0 0
  %67 = vperm.xlu0 %66, %v61
  %v68 = vpop.permute.xlu0 %67
  %71 = vset.pattern.permute.xlu0 0
  %72 = vperm.xlu0 %71, %v62
  %v73 = vpop.permute.xlu0 %72
  %76 = vset.pattern.permute.xlu0 0
  %77 = vperm.xlu0 %76, %v63
  %v78 = vpop.permute.xlu0 %77
  %81 = vset.pattern.permute.xlu0 0
  %82 = vperm.xlu0 %81, %v64
  %v83 = vpop.permute.xlu0 %82
  %v89 = vunpack.c.l.b16 %v56
  %v90 = vunpack.c.l.b16 %v57
  %v91 = vunpack.c.l.b16 %v58
  %v92 = vunpack.c.l.b16 %v59
  %v93 = vpack.c.b16 %v90, %v89
  %v94 = vpack.c.b16 %v92, %v91
  %vm95 = vcmask 31744
  %v97 = vsel %vm95, %v93, 0
  %v100 = vsel %vm95, %v94, 0
  %vm102 = vcmask 1041408
  %v104 = vsel %vm102, %v60, 0
  %106 = vmatprep.subr.bf16.mxu0 0
  %107 = vmatpush1.bf16.msra.mxu0 %v104
  %108 = vmatprep.subr.bf16.mxu0 0
  %109 = vmatpush1.bf16.msra.mxu0 0
  %110 = vmatprep.subr.bf16.mxu0 0
  %111 = vmatpush1.bf16.msra.mxu0 0
  %112 = vmatprep.subr.bf16.mxu0 0
  %113 = vmatpush1.bf16.msra.mxu0 0
  %114 = vmatprep.subr.bf16.mxu0 0
  %115 = vmatpush1.bf16.msra.mxu0 0
  %116 = vmatprep.subr.bf16.mxu0 0
  %117 = vmatpush1.bf16.msra.mxu0 0
  %118 = vmatprep.subr.bf16.mxu0 0
  %119 = vmatpush1.bf16.msra.mxu0 0
  %120 = vmatprep.subr.bf16.mxu0 0
  %121 = vmatpush1.bf16.msra.mxu0 0
  %122 = vmatprep.subr.bf16.mxu0 0
  %123 = vmatpush1.bf16.msra.mxu0 0
  %124 = vmatprep.subr.bf16.mxu0 0
  %125 = vmatpush1.bf16.msra.mxu0 0
  %126 = vmatprep.subr.bf16.mxu0 0
  %127 = vmatpush1.bf16.msra.mxu0 0
  %128 = vmatprep.subr.bf16.mxu0 0
  %129 = vmatpush1.bf16.msra.mxu0 0
  %130 = vmatprep.subr.bf16.mxu0 0
  %131 = vmatpush1.bf16.msra.mxu0 0
  %132 = vmatprep.subr.bf16.mxu0 0
  %133 = vmatpush1.bf16.msra.mxu0 0
  %134 = vmatprep.subr.bf16.mxu0 0
  %135 = vmatpush1.bf16.msra.mxu0 0
  %136 = vmatprep.subr.bf16.mxu0 0
  %137 = vmatpush1.bf16.msra.mxu0 0
  %138 = vmatprep.mubr.bf16.mxu0 0
  %139 = vmatmul.mubr.bf16.gmra.mrb[0].mxu0 %v97
  %v140 = vpop.f32.mrb[0].mxu0
  %v141 = vadd.f32 %v68, %v140
  %v142 = vpop.f32.mrb[0].mxu0
  %v143 = vpop.f32.mrb[0].mxu0
  %v144 = vadd.f32 %v73, %v143
  %v145 = vpop.f32.mrb[0].mxu0
  %146 = vmatprep.mubr.bf16.mxu0 0
  %147 = vmatmul.mubr.bf16.gmra.mrb[0].mxu0 %v100
  %v148 = vpop.f32.mrb[0].mxu0
  %v149 = vadd.f32 %v78, %v148
  %v150 = vpop.f32.mrb[0].mxu0
  %v151 = vpop.f32.mrb[0].mxu0
  %v152 = vadd.f32 %v83, %v151
  %v153 = vpop.f32.mrb[0].mxu0
  %154 = vdwg.mxu0
  %vm155 = vcmp.gt.f32.partialorder %v141, 0.0
  %vm156 = vcmp.gt.f32.partialorder %v144, 0.0
  %vm157 = vcmp.gt.f32.partialorder %v149, 0.0
  %vm158 = vcmp.gt.f32.partialorder %v152, 0.0
  %v159 = vmul.f32 %v141, 0.01
  %v160 = vmul.f32 %v144, 0.01
  %v161 = vmul.f32 %v149, 0.01
  %v162 = vmul.f32 %v152, 0.01
  %v163 = vsel %vm155, %v141, %v159
  %v164 = vsel %vm156, %v144, %v160
  %v165 = vsel %vm157, %v149, %v161
  %v166 = vsel %vm158, %v152, %v162
  %v167 = vpack.c.bf16 %v164, %v163
  %v168 = vpack.c.bf16 %v166, %v165
  %v169 = vld [vmem:[%s6] sm:$0xf]
  %v170 = vld [vmem:[%s6 + $0x4] sm:$0xf]
  %v171 = vld [vmem:[%s6 + $0x8] sm:$0xf]
  %v172 = vld [vmem:[%s6 + $0xc] sm:$0xf]
  %v173 = vld [vmem:[%s7] sm:$0xff]
  %v174 = vld [vmem:[%s7 + $0x8] sm:$0xff]
  %v175 = vld [vmem:[%s7 + $0x10] sm:$0xff]
  %v176 = vld [vmem:[%s7 + $0x18] sm:$0xff]
  %178 = vset.pattern.permute.xlu0 0
  %179 = vperm.xlu0 %178, %v173
  %v180 = vpop.permute.xlu0 %179
  %183 = vset.pattern.permute.xlu0 0
  %184 = vperm.xlu0 %183, %v174
  %v185 = vpop.permute.xlu0 %184
  %188 = vset.pattern.permute.xlu0 0
  %189 = vperm.xlu0 %188, %v175
  %v190 = vpop.permute.xlu0 %189
  %193 = vset.pattern.permute.xlu0 0
  %194 = vperm.xlu0 %193, %v176
  %v195 = vpop.permute.xlu0 %194
  %v201 = vunpack.c.l.b16 %v169
  %v202 = vunpack.c.l.b16 %v170
  %v203 = vunpack.c.l.b16 %v171
  %v204 = vunpack.c.l.b16 %v172
  %v205 = vpack.c.b16 %v202, %v201
  %v206 = vpack.c.b16 %v204, %v203
  %vm207 = vcmask 261120
  %v209 = vsel %vm207, %v205, 0
  %v212 = vsel %vm207, %v206, 0
  %214 = vmatprep.subr.bf16.mxu0 0
  %215 = vmatpush1.bf16.msra.mxu0 %v167
  %216 = vmatprep.subr.bf16.mxu0 0
  %217 = vmatpush1.bf16.msra.mxu0 %v168
  %218 = vmatprep.subr.bf16.mxu0 0
  %219 = vmatpush1.bf16.msra.mxu0 0
  %220 = vmatprep.subr.bf16.mxu0 0
  %221 = vmatpush1.bf16.msra.mxu0 0
  %222 = vmatprep.subr.bf16.mxu0 0
  %223 = vmatpush1.bf16.msra.mxu0 0
  %224 = vmatprep.subr.bf16.mxu0 0
  %225 = vmatpush1.bf16.msra.mxu0 0
  %226 = vmatprep.subr.bf16.mxu0 0
  %227 = vmatpush1.bf16.msra.mxu0 0
  %228 = vmatprep.subr.bf16.mxu0 0
  %229 = vmatpush1.bf16.msra.mxu0 0
  %230 = vmatprep.subr.bf16.mxu0 0
  %231 = vmatpush1.bf16.msra.mxu0 0
  %232 = vmatprep.subr.bf16.mxu0 0
  %233 = vmatpush1.bf16.msra.mxu0 0
  %234 = vmatprep.subr.bf16.mxu0 0
  %235 = vmatpush1.bf16.msra.mxu0 0
  %236 = vmatprep.subr.bf16.mxu0 0
  %237 = vmatpush1.bf16.msra.mxu0 0
  %238 = vmatprep.subr.bf16.mxu0 0
  %239 = vmatpush1.bf16.msra.mxu0 0
  %240 = vmatprep.subr.bf16.mxu0 0
  %241 = vmatpush1.bf16.msra.mxu0 0
  %242 = vmatprep.subr.bf16.mxu0 0
  %243 = vmatpush1.bf16.msra.mxu0 0
  %244 = vmatprep.subr.bf16.mxu0 0
  %245 = vmatpush1.bf16.msra.mxu0 0
  %246 = vmatprep.mubr.bf16.mxu0 0
  %247 = vmatmul.mubr.bf16.gmra.mrb[0].mxu0 %v209
  %v248 = vpop.f32.mrb[0].mxu0
  %v249 = vadd.f32 %v180, %v248
  %v250 = vpop.f32.mrb[0].mxu0
  %v251 = vpop.f32.mrb[0].mxu0
  %v252 = vadd.f32 %v185, %v251
  %v253 = vpop.f32.mrb[0].mxu0
  %254 = vmatprep.mubr.bf16.mxu0 0
  %255 = vmatmul.mubr.bf16.gmra.mrb[0].mxu0 %v212
  %v256 = vpop.f32.mrb[0].mxu0
  %v257 = vadd.f32 %v190, %v256
  %v258 = vpop.f32.mrb[0].mxu0
  %v259 = vpop.f32.mrb[0].mxu0
  %v260 = vadd.f32 %v195, %v259
  %v261 = vpop.f32.mrb[0].mxu0
  %262 = vdwg.mxu0
  %v263 = vxor.u32 %v249, 2147483648
  %v264 = vxor.u32 %v252, 2147483648
  %v265 = vxor.u32 %v257, 2147483648
  %v266 = vxor.u32 %v260, 2147483648
  %v267 = vmul.f32 %v263, 1.442695
  %v268 = vpow.pop %v267
  %v269 = vmul.f32 %v264, 1.442695
  %v270 = vpow.pop %v269
  %v271 = vmul.f32 %v265, 1.442695
  %v272 = vpow.pop %v271
  %v273 = vmul.f32 %v266, 1.442695
  %v274 = vpow.pop %v273
  %v275 = vadd.f32 %v268, 1.0
  %v276 = vadd.f32 %v270, 1.0
  %v277 = vadd.f32 %v272, 1.0
  %v278 = vadd.f32 %v274, 1.0
  %v279 = vrcp.pop %v275
  %v280 = vmul.f32 1.0, %v279
  %v281 = vrcp.pop %v276
  %v282 = vmul.f32 1.0, %v281
  %v283 = vrcp.pop %v277
  %v284 = vmul.f32 1.0, %v283
  %v285 = vrcp.pop %v278
  %v286 = vmul.f32 1.0, %v285
  %v287 = vld [vmem:[%s8] sm:$0xf]
  %v288 = vld [vmem:[%s8 + $0x4] sm:$0xf]
  %v289 = vld [vmem:[%s8 + $0x8] sm:$0xf]
  %v290 = vld [vmem:[%s8 + $0xc] sm:$0xf]
  %v291 = vld [vmem:[%s9] sm:$0xff]
  %v292 = vld [vmem:[%s9 + $0x8] sm:$0xff]
  %v293 = vld [vmem:[%s9 + $0x10] sm:$0xff]
  %v294 = vld [vmem:[%s9 + $0x18] sm:$0xff]
  %296 = vset.pattern.permute.xlu0 0
  %297 = vperm.xlu0 %296, %v291
  %v298 = vpop.permute.xlu0 %297
  %301 = vset.pattern.permute.xlu0 0
  %302 = vperm.xlu0 %301, %v292
  %v303 = vpop.permute.xlu0 %302
  %306 = vset.pattern.permute.xlu0 0
  %307 = vperm.xlu0 %306, %v293
  %v308 = vpop.permute.xlu0 %307
  %311 = vset.pattern.permute.xlu0 0
  %312 = vperm.xlu0 %311, %v294
  %v313 = vpop.permute.xlu0 %312
  %v319 = vunpack.c.l.b16 %v287
  %v320 = vunpack.c.l.b16 %v288
  %v321 = vunpack.c.l.b16 %v289
  %v322 = vunpack.c.l.b16 %v290
  %v323 = vpack.c.b16 %v320, %v319
  %v324 = vpack.c.b16 %v322, %v321
  %v326 = vsel %vm207, %v323, 0
  %v329 = vsel %vm207, %v324, 0
  %331 = vmatprep.subr.bf16.mxu0 0
  %332 = vmatpush1.bf16.msra.mxu0 %v167
  %333 = vmatprep.subr.bf16.mxu0 0
  %334 = vmatpush1.bf16.msra.mxu0 %v168
  %335 = vmatprep.subr.bf16.mxu0 0
  %336 = vmatpush1.bf16.msra.mxu0 0
  %337 = vmatprep.subr.bf16.mxu0 0
  %338 = vmatpush1.bf16.msra.mxu0 0
  %339 = vmatprep.subr.bf16.mxu0 0
  %340 = vmatpush1.bf16.msra.mxu0 0
  %341 = vmatprep.subr.bf16.mxu0 0
  %342 = vmatpush1.bf16.msra.mxu0 0
  %343 = vmatprep.subr.bf16.mxu0 0
  %344 = vmatpush1.bf16.msra.mxu0 0
  %345 = vmatprep.subr.bf16.mxu0 0
  %346 = vmatpush1.bf16.msra.mxu0 0
  %347 = vmatprep.subr.bf16.mxu0 0
  %348 = vmatpush1.bf16.msra.mxu0 0
  %349 = vmatprep.subr.bf16.mxu0 0
  %350 = vmatpush1.bf16.msra.mxu0 0
  %351 = vmatprep.subr.bf16.mxu0 0
  %352 = vmatpush1.bf16.msra.mxu0 0
  %353 = vmatprep.subr.bf16.mxu0 0
  %354 = vmatpush1.bf16.msra.mxu0 0
  %355 = vmatprep.subr.bf16.mxu0 0
  %356 = vmatpush1.bf16.msra.mxu0 0
  %357 = vmatprep.subr.bf16.mxu0 0
  %358 = vmatpush1.bf16.msra.mxu0 0
  %359 = vmatprep.subr.bf16.mxu0 0
  %360 = vmatpush1.bf16.msra.mxu0 0
  %361 = vmatprep.subr.bf16.mxu0 0
  %362 = vmatpush1.bf16.msra.mxu0 0
  %363 = vmatprep.mubr.bf16.mxu0 0
  %364 = vmatmul.mubr.bf16.gmra.mrb[0].mxu0 %v326
  %v365 = vpop.f32.mrb[0].mxu0
  %v366 = vadd.f32 %v298, %v365
  %v367 = vpop.f32.mrb[0].mxu0
  %v368 = vpop.f32.mrb[0].mxu0
  %v369 = vadd.f32 %v303, %v368
  %v370 = vpop.f32.mrb[0].mxu0
  %371 = vmatprep.mubr.bf16.mxu0 0
  %372 = vmatmul.mubr.bf16.gmra.mrb[0].mxu0 %v329
  %v373 = vpop.f32.mrb[0].mxu0
  %v374 = vadd.f32 %v308, %v373
  %v375 = vpop.f32.mrb[0].mxu0
  %v376 = vpop.f32.mrb[0].mxu0
  %v377 = vadd.f32 %v313, %v376
  %v378 = vpop.f32.mrb[0].mxu0
  %379 = vdwg.mxu0
  %v380 = vmul.f32 %v280, %v366
  %v381 = vmul.f32 %v282, %v369
  %v382 = vmul.f32 %v284, %v374
  %v383 = vmul.f32 %v286, %v377
  %v384 = vadd.f32 %v380, %v163
  %v385 = vadd.f32 %v381, %v164
  %v386 = vadd.f32 %v382, %v165
  %v387 = vadd.f32 %v383, %v166
  %v388 = vld [vmem:[%s10] sm:$0xf]
  %v389 = vld [vmem:[%s10 + $0x4] sm:$0xf]
  %v390 = vld [vmem:[%s10 + $0x8] sm:$0xf]
  %v391 = vld [vmem:[%s10 + $0xc] sm:$0xf]
  %v392 = vld [vmem:[%s10 + $0x10] sm:$0xf]
  %v393 = vld [vmem:[%s10 + $0x14] sm:$0xf]
  %v394 = vld [vmem:[%s10 + $0x18] sm:$0xf]
  %v395 = vld [vmem:[%s10 + $0x1c] sm:$0xf]
  %v396 = vpack.c.bf16 %v385, %v384
  %v397 = vpack.c.bf16 %v387, %v386
  %v398 = vld [vmem:[%s12] sm:$0xff]
  %v399 = vld [vmem:[%s12 + $0x8] sm:$0xff]
  %v400 = vld [vmem:[%s12 + $0x10] sm:$0xff]
  %v401 = vld [vmem:[%s12 + $0x18] sm:$0xff]
  %v402 = vld [vmem:[%s12 + $0x20] sm:$0xff]
  %v403 = vld [vmem:[%s12 + $0x28] sm:$0xff]
  %v404 = vld [vmem:[%s12 + $0x30] sm:$0xff]
  %v405 = vld [vmem:[%s12 + $0x38] sm:$0xff]
  %407 = vset.pattern.permute.xlu0 0
  %408 = vperm.xlu0 %407, %v398
  %v409 = vpop.permute.xlu0 %408
  %412 = vset.pattern.permute.xlu0 0
  %413 = vperm.xlu0 %412, %v399
  %v414 = vpop.permute.xlu0 %413
  %417 = vset.pattern.permute.xlu0 0
  %418 = vperm.xlu0 %417, %v400
  %v419 = vpop.permute.xlu0 %418
  %422 = vset.pattern.permute.xlu0 0
  %423 = vperm.xlu0 %422, %v401
  %v424 = vpop.permute.xlu0 %423
  %427 = vset.pattern.permute.xlu0 0
  %428 = vperm.xlu0 %427, %v402
  %v429 = vpop.permute.xlu0 %428
  %432 = vset.pattern.permute.xlu0 0
  %433 = vperm.xlu0 %432, %v403
  %v434 = vpop.permute.xlu0 %433
  %437 = vset.pattern.permute.xlu0 0
  %438 = vperm.xlu0 %437, %v404
  %v439 = vpop.permute.xlu0 %438
  %442 = vset.pattern.permute.xlu0 0
  %443 = vperm.xlu0 %442, %v405
  %v444 = vpop.permute.xlu0 %443
  %v454 = vunpack.c.l.b16 %v388
  %v455 = vunpack.c.l.b16 %v389
  %v456 = vunpack.c.l.b16 %v390
  %v457 = vunpack.c.l.b16 %v391
  %v458 = vunpack.c.l.b16 %v392
  %v459 = vunpack.c.l.b16 %v393
  %v460 = vunpack.c.l.b16 %v394
  %v461 = vunpack.c.l.b16 %v395
  %v462 = vpack.c.b16 %v455, %v454
  %v463 = vpack.c.b16 %v457, %v456
  %v464 = vpack.c.b16 %v459, %v458
  %v465 = vpack.c.b16 %v461, %v460
  %v467 = vsel %vm207, %v462, 0
  %v470 = vsel %vm207, %v463, 0
  %v473 = vsel %vm207, %v464, 0
  %v476 = vsel %vm207, %v465, 0
  %478 = vmatprep.subr.bf16.mxu0 0
  %479 = vmatpush1.bf16.msra.mxu0 %v396
  %480 = vmatprep.subr.bf16.mxu0 0
  %481 = vmatpush1.bf16.msra.mxu0 %v397
  %482 = vmatprep.subr.bf16.mxu0 0
  %483 = vmatpush1.bf16.msra.mxu0 0
  %484 = vmatprep.subr.bf16.mxu0 0
  %485 = vmatpush1.bf16.msra.mxu0 0
  %486 = vmatprep.subr.bf16.mxu0 0
  %487 = vmatpush1.bf16.msra.mxu0 0
  %488 = vmatprep.subr.bf16.mxu0 0
  %489 = vmatpush1.bf16.msra.mxu0 0
  %490 = vmatprep.subr.bf16.mxu0 0
  %491 = vmatpush1.bf16.msra.mxu0 0
  %492 = vmatprep.subr.bf16.mxu0 0
  %493 = vmatpush1.bf16.msra.mxu0 0
  %494 = vmatprep.subr.bf16.mxu0 0
  %495 = vmatpush1.bf16.msra.mxu0 0
  %496 = vmatprep.subr.bf16.mxu0 0
  %497 = vmatpush1.bf16.msra.mxu0 0
  %498 = vmatprep.subr.bf16.mxu0 0
  %499 = vmatpush1.bf16.msra.mxu0 0
  %500 = vmatprep.subr.bf16.mxu0 0
  %501 = vmatpush1.bf16.msra.mxu0 0
  %502 = vmatprep.subr.bf16.mxu0 0
  %503 = vmatpush1.bf16.msra.mxu0 0
  %504 = vmatprep.subr.bf16.mxu0 0
  %505 = vmatpush1.bf16.msra.mxu0 0
  %506 = vmatprep.subr.bf16.mxu0 0
  %507 = vmatpush1.bf16.msra.mxu0 0
  %508 = vmatprep.subr.bf16.mxu0 0
  %509 = vmatpush1.bf16.msra.mxu0 0
  %510 = vmatprep.mubr.bf16.mxu0 0
  %511 = vmatmul.mubr.bf16.gmra.mrb[0].mxu0 %v467
  %v512 = vpop.f32.mrb[0].mxu0
  %v513 = vadd.f32 %v409, %v512
  %v514 = vpop.f32.mrb[0].mxu0
  %v515 = vpop.f32.mrb[0].mxu0
  %v516 = vadd.f32 %v414, %v515
  %v517 = vpop.f32.mrb[0].mxu0
  %518 = vmatprep.mubr.bf16.mxu0 0
  %519 = vmatmul.mubr.bf16.gmra.mrb[0].mxu0 %v470
  %v520 = vpop.f32.mrb[0].mxu0
  %v521 = vadd.f32 %v419, %v520
  %v522 = vpop.f32.mrb[0].mxu0
  %v523 = vpop.f32.mrb[0].mxu0
  %v524 = vadd.f32 %v424, %v523
  %v525 = vpop.f32.mrb[0].mxu0
  %526 = vmatprep.mubr.bf16.mxu0 0
  %527 = vmatmul.mubr.bf16.gmra.mrb[0].mxu0 %v473
  %v528 = vpop.f32.mrb[0].mxu0
  %v529 = vadd.f32 %v429, %v528
  %v530 = vpop.f32.mrb[0].mxu0
  %v531 = vpop.f32.mrb[0].mxu0
  %v532 = vadd.f32 %v434, %v531
  %v533 = vpop.f32.mrb[0].mxu0
  %534 = vmatprep.mubr.bf16.mxu0 0
  %535 = vmatmul.mubr.bf16.gmra.mrb[0].mxu0 %v476
  %v536 = vpop.f32.mrb[0].mxu0
  %v537 = vadd.f32 %v439, %v536
  %v538 = vpop.f32.mrb[0].mxu0
  %v539 = vpop.f32.mrb[0].mxu0
  %v540 = vadd.f32 %v444, %v539
  %v541 = vpop.f32.mrb[0].mxu0
  %542 = vdwg.mxu0
  %v543 = vpack.c.bf16 %v516, %v513
  %v544 = vpack.c.bf16 %v524, %v521
  %v545 = vpack.c.bf16 %v532, %v529
  %v546 = vpack.c.bf16 %v540, %v537
  %v547 = vld [vmem:[%s2] sm:$0xf]
  %v548 = vld [vmem:[%s2 + $0x4] sm:$0xf]
  %v549 = vld [vmem:[%s2 + $0x8] sm:$0xf]
  %v550 = vld [vmem:[%s2 + $0xc] sm:$0xf]
  %v555 = vunpack.c.l.b16 %v547
  %v556 = vunpack.c.l.b16 %v548
  %v557 = vunpack.c.l.b16 %v549
  %v558 = vunpack.c.l.b16 %v550
  %v559 = vpack.c.b16 %v556, %v555
  %v560 = vpack.c.b16 %v558, %v557
  %v564 = vsel %vm207, %v543, 0
  %v567 = vsel %vm207, %v544, 0
  %v570 = vsel %vm207, %v545, 0
  %v573 = vsel %vm207, %v546, 0
  %575 = vmatprep.subr.bf16.mxu0 0
  %576 = vmatpush1.bf16.msra.mxu0 %v559
  %577 = vmatprep.subr.bf16.mxu0 0
  %578 = vmatpush1.bf16.msra.mxu0 %v560
  %579 = vmatprep.subr.bf16.mxu0 0
  %580 = vmatpush1.bf16.msra.mxu0 0
  %581 = vmatprep.subr.bf16.mxu0 0
  %582 = vmatpush1.bf16.msra.mxu0 0
  %583 = vmatprep.subr.bf16.mxu0 0
  %584 = vmatpush1.bf16.msra.mxu0 0
  %585 = vmatprep.subr.bf16.mxu0 0
  %586 = vmatpush1.bf16.msra.mxu0 0
  %587 = vmatprep.subr.bf16.mxu0 0
  %588 = vmatpush1.bf16.msra.mxu0 0
  %589 = vmatprep.subr.bf16.mxu0 0
  %590 = vmatpush1.bf16.msra.mxu0 0
  %591 = vmatprep.subr.bf16.mxu0 0
  %592 = vmatpush1.bf16.msra.mxu0 0
  %593 = vmatprep.subr.bf16.mxu0 0
  %594 = vmatpush1.bf16.msra.mxu0 0
  %595 = vmatprep.subr.bf16.mxu0 0
  %596 = vmatpush1.bf16.msra.mxu0 0
  %597 = vmatprep.subr.bf16.mxu0 0
  %598 = vmatpush1.bf16.msra.mxu0 0
  %599 = vmatprep.subr.bf16.mxu0 0
  %600 = vmatpush1.bf16.msra.mxu0 0
  %601 = vmatprep.subr.bf16.mxu0 0
  %602 = vmatpush1.bf16.msra.mxu0 0
  %603 = vmatprep.subr.bf16.mxu0 0
  %604 = vmatpush1.bf16.msra.mxu0 0
  %605 = vmatprep.subr.bf16.mxu0 0
  %606 = vmatpush1.bf16.msra.mxu0 0
  %607 = vmatprep.mubr.bf16.mxu0 0
  %608 = vmatmul.mubr.bf16.gmra.mrb[0].mxu0 %v564
  %v609 = vpop.f32.mrb[0].mxu0
  %v610 = vadd.f32 0.0, %v609
  %v611 = vpop.f32.mrb[0].mxu0
  %v612 = vpop.f32.mrb[0].mxu0
  %v613 = vadd.f32 0.0, %v612
  %v614 = vpop.f32.mrb[0].mxu0
  %615 = vmatprep.mubr.bf16.mxu0 0
  %616 = vmatmul.mubr.bf16.gmra.mrb[0].mxu0 %v567
  %v617 = vpop.f32.mrb[0].mxu0
  %v618 = vadd.f32 0.0, %v617
  %v619 = vpop.f32.mrb[0].mxu0
  %v620 = vpop.f32.mrb[0].mxu0
  %v621 = vadd.f32 0.0, %v620
  %v622 = vpop.f32.mrb[0].mxu0
  %623 = vmatprep.mubr.bf16.mxu0 0
  %624 = vmatmul.mubr.bf16.gmra.mrb[0].mxu0 %v570
  %v625 = vpop.f32.mrb[0].mxu0
  %v626 = vadd.f32 0.0, %v625
  %v627 = vpop.f32.mrb[0].mxu0
  %v628 = vpop.f32.mrb[0].mxu0
  %v629 = vadd.f32 0.0, %v628
  %v630 = vpop.f32.mrb[0].mxu0
  %631 = vmatprep.mubr.bf16.mxu0 0
  %632 = vmatmul.mubr.bf16.gmra.mrb[0].mxu0 %v573
  %v633 = vpop.f32.mrb[0].mxu0
  %v634 = vadd.f32 0.0, %v633
  %v635 = vpop.f32.mrb[0].mxu0
  %v636 = vpop.f32.mrb[0].mxu0
  %v637 = vadd.f32 0.0, %v636
  %v638 = vpop.f32.mrb[0].mxu0
  %639 = vdwg.mxu0
  %v640 = vld [vmem:[%s11] sm:$0xf]
  %v641 = vld [vmem:[%s11 + $0x4] sm:$0xf]
  %v642 = vld [vmem:[%s11 + $0x8] sm:$0xf]
  %v643 = vld [vmem:[%s11 + $0xc] sm:$0xf]
  %v644 = vld [vmem:[%s11 + $0x10] sm:$0xf]
  %v645 = vld [vmem:[%s11 + $0x14] sm:$0xf]
  %v646 = vld [vmem:[%s11 + $0x18] sm:$0xf]
  %v647 = vld [vmem:[%s11 + $0x1c] sm:$0xf]
  %v648 = vpack.c.bf16 %v613, %v610
  %v649 = vpack.c.bf16 %v621, %v618
  %v650 = vpack.c.bf16 %v629, %v626
  %v651 = vpack.c.bf16 %v637, %v634
  %v660 = vunpack.c.l.b16 %v640
  %v661 = vunpack.c.l.b16 %v641
  %v662 = vunpack.c.l.b16 %v642
  %v663 = vunpack.c.l.b16 %v643
  %v664 = vunpack.c.l.b16 %v644
  %v665 = vunpack.c.l.b16 %v645
  %v666 = vunpack.c.l.b16 %v646
  %v667 = vunpack.c.l.b16 %v647
  %v668 = vpack.c.b16 %v661, %v660
  %v669 = vpack.c.b16 %v663, %v662
  %v670 = vpack.c.b16 %v665, %v664
  %v671 = vpack.c.b16 %v667, %v666
  %vm672 = vcmask 523264
  %v674 = vsel %vm672, %v668, 0
  %v677 = vsel %vm672, %v669, 0
  %v680 = vsel %vm672, %v670, 0
  %v683 = vsel %vm672, %v671, 0
  %685 = vmatprep.subr.bf16.mxu0 0
  %686 = vmatpush1.bf16.msra.mxu0 %v648
  %687 = vmatprep.subr.bf16.mxu0 0
  %688 = vmatpush1.bf16.msra.mxu0 %v649
  %689 = vmatprep.subr.bf16.mxu0 0
  %690 = vmatpush1.bf16.msra.mxu0 %v650
  %691 = vmatprep.subr.bf16.mxu0 0
  %692 = vmatpush1.bf16.msra.mxu0 %v651
  %693 = vmatprep.subr.bf16.mxu0 0
  %694 = vmatpush1.bf16.msra.mxu0 0
  %695 = vmatprep.subr.bf16.mxu0 0
  %696 = vmatpush1.bf16.msra.mxu0 0
  %697 = vmatprep.subr.bf16.mxu0 0
  %698 = vmatpush1.bf16.msra.mxu0 0
  %699 = vmatprep.subr.bf16.mxu0 0
  %700 = vmatpush1.bf16.msra.mxu0 0
  %701 = vmatprep.subr.bf16.mxu0 0
  %702 = vmatpush1.bf16.msra.mxu0 0
  %703 = vmatprep.subr.bf16.mxu0 0
  %704 = vmatpush1.bf16.msra.mxu0 0
  %705 = vmatprep.subr.bf16.mxu0 0
  %706 = vmatpush1.bf16.msra.mxu0 0
  %707 = vmatprep.subr.bf16.mxu0 0
  %708 = vmatpush1.bf16.msra.mxu0 0
  %709 = vmatprep.subr.bf16.mxu0 0
  %710 = vmatpush1.bf16.msra.mxu0 0
  %711 = vmatprep.subr.bf16.mxu0 0
  %712 = vmatpush1.bf16.msra.mxu0 0
  %713 = vmatprep.subr.bf16.mxu0 0
  %714 = vmatpush1.bf16.msra.mxu0 0
  %715 = vmatprep.subr.bf16.mxu0 0
  %716 = vmatpush1.bf16.msra.mxu0 0
  %717 = vmatprep.mubr.bf16.mxu0 0
  %718 = vmatmul.mubr.bf16.gmra.mrb[0].mxu0 %v674
  %v719 = vpop.f32.mrb[0].mxu0
  %v720 = vadd.f32 %v409, %v719
  %v721 = vpop.f32.mrb[0].mxu0
  %v722 = vpop.f32.mrb[0].mxu0
  %v723 = vadd.f32 %v414, %v722
  %v724 = vpop.f32.mrb[0].mxu0
  %725 = vmatprep.mubr.bf16.mxu0 0
  %726 = vmatmul.mubr.bf16.gmra.mrb[0].mxu0 %v677
  %v727 = vpop.f32.mrb[0].mxu0
  %v728 = vadd.f32 %v419, %v727
  %v729 = vpop.f32.mrb[0].mxu0
  %v730 = vpop.f32.mrb[0].mxu0
  %v731 = vadd.f32 %v424, %v730
  %v732 = vpop.f32.mrb[0].mxu0
  %733 = vmatprep.mubr.bf16.mxu0 0
  %734 = vmatmul.mubr.bf16.gmra.mrb[0].mxu0 %v680
  %v735 = vpop.f32.mrb[0].mxu0
  %v736 = vadd.f32 %v429, %v735
  %v737 = vpop.f32.mrb[0].mxu0
  %v738 = vpop.f32.mrb[0].mxu0
  %v739 = vadd.f32 %v434, %v738
  %v740 = vpop.f32.mrb[0].mxu0
  %741 = vmatprep.mubr.bf16.mxu0 0
  %742 = vmatmul.mubr.bf16.gmra.mrb[0].mxu0 %v683
  %v743 = vpop.f32.mrb[0].mxu0
  %v744 = vadd.f32 %v439, %v743
  %v745 = vpop.f32.mrb[0].mxu0
  %v746 = vpop.f32.mrb[0].mxu0
  %v747 = vadd.f32 %v444, %v746
  %v748 = vpop.f32.mrb[0].mxu0
  %749 = vdwg.mxu0
  %v750 = vpack.c.bf16 %v723, %v720
  %v751 = vpack.c.bf16 %v731, %v728
  %v752 = vpack.c.bf16 %v739, %v736
  %v753 = vpack.c.bf16 %v747, %v744
  %v754 = vld [vmem:[%s3] sm:$0xf]
  %v755 = vld [vmem:[%s3 + $0x4] sm:$0xf]
  %v756 = vld [vmem:[%s3 + $0x8] sm:$0xf]
  %v757 = vld [vmem:[%s3 + $0xc] sm:$0xf]
  %v762 = vunpack.c.l.b16 %v754
  %v763 = vunpack.c.l.b16 %v755
  %v764 = vunpack.c.l.b16 %v756
  %v765 = vunpack.c.l.b16 %v757
  %v766 = vpack.c.b16 %v763, %v762
  %v767 = vpack.c.b16 %v765, %v764
  %v771 = vsel %vm207, %v750, 0
  %v774 = vsel %vm207, %v751, 0
  %v777 = vsel %vm207, %v752, 0
  %v780 = vsel %vm207, %v753, 0
  %782 = vmatprep.subr.bf16.mxu0 0
  %783 = vmatpush1.bf16.msra.mxu0 %v766
  %784 = vmatprep.subr.bf16.mxu0 0
  %785 = vmatpush1.bf16.msra.mxu0 %v767
  %786 = vmatprep.subr.bf16.mxu0 0
  %787 = vmatpush1.bf16.msra.mxu0 0
  %788 = vmatprep.subr.bf16.mxu0 0
  %789 = vmatpush1.bf16.msra.mxu0 0
  %790 = vmatprep.subr.bf16.mxu0 0
  %791 = vmatpush1.bf16.msra.mxu0 0
  %792 = vmatprep.subr.bf16.mxu0 0
  %793 = vmatpush1.bf16.msra.mxu0 0
  %794 = vmatprep.subr.bf16.mxu0 0
  %795 = vmatpush1.bf16.msra.mxu0 0
  %796 = vmatprep.subr.bf16.mxu0 0
  %797 = vmatpush1.bf16.msra.mxu0 0
  %798 = vmatprep.subr.bf16.mxu0 0
  %799 = vmatpush1.bf16.msra.mxu0 0
  %800 = vmatprep.subr.bf16.mxu0 0
  %801 = vmatpush1.bf16.msra.mxu0 0
  %802 = vmatprep.subr.bf16.mxu0 0
  %803 = vmatpush1.bf16.msra.mxu0 0
  %804 = vmatprep.subr.bf16.mxu0 0
  %805 = vmatpush1.bf16.msra.mxu0 0
  %806 = vmatprep.subr.bf16.mxu0 0
  %807 = vmatpush1.bf16.msra.mxu0 0
  %808 = vmatprep.subr.bf16.mxu0 0
  %809 = vmatpush1.bf16.msra.mxu0 0
  %810 = vmatprep.subr.bf16.mxu0 0
  %811 = vmatpush1.bf16.msra.mxu0 0
  %812 = vmatprep.subr.bf16.mxu0 0
  %813 = vmatpush1.bf16.msra.mxu0 0
  %814 = vmatprep.mubr.bf16.mxu0 0
  %815 = vmatmul.mubr.bf16.gmra.mrb[0].mxu0 %v771
  %v816 = vpop.f32.mrb[0].mxu0
  %v817 = vadd.f32 0.0, %v816
  %v818 = vpop.f32.mrb[0].mxu0
  %v819 = vpop.f32.mrb[0].mxu0
  %v820 = vadd.f32 0.0, %v819
  %v821 = vpop.f32.mrb[0].mxu0
  %822 = vmatprep.mubr.bf16.mxu0 0
  %823 = vmatmul.mubr.bf16.gmra.mrb[0].mxu0 %v774
  %v824 = vpop.f32.mrb[0].mxu0
  %v825 = vadd.f32 0.0, %v824
  %v826 = vpop.f32.mrb[0].mxu0
  %v827 = vpop.f32.mrb[0].mxu0
  %v828 = vadd.f32 0.0, %v827
  %v829 = vpop.f32.mrb[0].mxu0
  %830 = vmatprep.mubr.bf16.mxu0 0
  %831 = vmatmul.mubr.bf16.gmra.mrb[0].mxu0 %v777
  %v832 = vpop.f32.mrb[0].mxu0
  %v833 = vadd.f32 0.0, %v832
  %v834 = vpop.f32.mrb[0].mxu0
  %v835 = vpop.f32.mrb[0].mxu0
  %v836 = vadd.f32 0.0, %v835
  %v837 = vpop.f32.mrb[0].mxu0
  %838 = vmatprep.mubr.bf16.mxu0 0
  %839 = vmatmul.mubr.bf16.gmra.mrb[0].mxu0 %v780
  %v840 = vpop.f32.mrb[0].mxu0
  %v841 = vadd.f32 0.0, %v840
  %v842 = vpop.f32.mrb[0].mxu0
  %v843 = vpop.f32.mrb[0].mxu0
  %v844 = vadd.f32 0.0, %v843
  %v845 = vpop.f32.mrb[0].mxu0
  %846 = vdwg.mxu0
  %v847 = vld [vmem:[%s13] sm:$0xff]
  %v848 = vld [vmem:[%s13 + $0x8] sm:$0xff]
  %v849 = vld [vmem:[%s13 + $0x10] sm:$0xff]
  %v850 = vld [vmem:[%s13 + $0x18] sm:$0xff]
  %v851 = vld [vmem:[%s14] sm:$0xff]
  %v852 = vld [vmem:[%s14 + $0x8] sm:$0xff]
  %v853 = vld [vmem:[%s14 + $0x10] sm:$0xff]
  %v854 = vld [vmem:[%s14 + $0x18] sm:$0xff]
  %v855 = vld [vmem:[%s15] sm:$0xff]
  %v856 = vld [vmem:[%s15 + $0x8] sm:$0xff]
  %v857 = vld [vmem:[%s15 + $0x10] sm:$0xff]
  %v858 = vld [vmem:[%s15 + $0x18] sm:$0xff]
  %v860 = vsel %vm207, %v817, 0
  %v863 = vsel %vm207, %v820, 0
  %v866 = vsel %vm207, %v825, 0
  %v869 = vsel %vm207, %v828, 0
  %871 = vmatprep.subr.mxu0 0.0
  %872 = vmatpush1.msra.mxu0 %v855
  %873 = vmatprep.subr.mxu0 0.0
  %874 = vmatpush1.msra.mxu0 %v856
  %875 = vmatprep.subr.mxu0 0.0
  %876 = vmatpush1.msra.mxu0 %v857
  %877 = vmatprep.subr.mxu0 0.0
  %878 = vmatpush1.msra.mxu0 %v858
  %879 = vmatprep.subr.mxu0 0.0
  %880 = vmatpush1.msra.mxu0 0.0
  %881 = vmatprep.subr.mxu0 0.0
  %882 = vmatpush1.msra.mxu0 0.0
  %883 = vmatprep.subr.mxu0 0.0
  %884 = vmatpush1.msra.mxu0 0.0
  %885 = vmatprep.subr.mxu0 0.0
  %886 = vmatpush1.msra.mxu0 0.0
  %887 = vmatprep.subr.mxu0 0.0
  %888 = vmatpush1.msra.mxu0 0.0
  %889 = vmatprep.subr.mxu0 0.0
  %890 = vmatpush1.msra.mxu0 0.0
  %891 = vmatprep.subr.mxu0 0.0
  %892 = vmatpush1.msra.mxu0 0.0
  %893 = vmatprep.subr.mxu0 0.0
  %894 = vmatpush1.msra.mxu0 0.0
  %895 = vmatprep.subr.mxu0 0.0
  %896 = vmatpush1.msra.mxu0 0.0
  %897 = vmatprep.subr.mxu0 0.0
  %898 = vmatpush1.msra.mxu0 0.0
  %899 = vmatprep.subr.mxu0 0.0
  %900 = vmatpush1.msra.mxu0 0.0
  %901 = vmatprep.subr.mxu0 0.0
  %902 = vmatpush1.msra.mxu0 0.0
  %903 = vmatprep.subr.mxu0 0.0
  %904 = vmatpush1.msra.mxu0 0.0
  %905 = vmatprep.subr.mxu0 0.0
  %906 = vmatpush1.msra.mxu0 0.0
  %907 = vmatprep.subr.mxu0 0.0
  %908 = vmatpush1.msra.mxu0 0.0
  %909 = vmatprep.subr.mxu0 0.0
  %910 = vmatpush1.msra.mxu0 0.0
  %911 = vmatprep.subr.mxu0 0.0
  %912 = vmatpush1.msra.mxu0 0.0
  %913 = vmatprep.subr.mxu0 0.0
  %914 = vmatpush1.msra.mxu0 0.0
  %915 = vmatprep.subr.mxu0 0.0
  %916 = vmatpush1.msra.mxu0 0.0
  %917 = vmatprep.subr.mxu0 0.0
  %918 = vmatpush1.msra.mxu0 0.0
  %919 = vmatprep.subr.mxu0 0.0
  %920 = vmatpush1.msra.mxu0 0.0
  %921 = vmatprep.subr.mxu0 0.0
  %922 = vmatpush1.msra.mxu0 0.0
  %923 = vmatprep.subr.mxu0 0.0
  %924 = vmatpush1.msra.mxu0 0.0
  %925 = vmatprep.subr.mxu0 0.0
  %926 = vmatpush1.msra.mxu0 0.0
  %927 = vmatprep.subr.mxu0 0.0
  %928 = vmatpush1.msra.mxu0 0.0
  %929 = vmatprep.subr.mxu0 0.0
  %930 = vmatpush1.msra.mxu0 0.0
  %931 = vmatprep.subr.mxu0 0.0
  %932 = vmatpush1.msra.mxu0 0.0
  %933 = vmatprep.subr.mxu0 0.0
  %934 = vmatpush1.msra.mxu0 0.0
  %935 = vmatprep.mubr.f32.mxu0 0.0
  %936 = vmatmul.mubr.f32.gmra.mrb[0].mxu0 %v860
  %v937 = vpop.f32.mrb[0].mxu0
  %v938 = vadd.f32 0.0, %v937
  %v939 = vpop.f32.mrb[0].mxu0
  %940 = vmatprep.mubr.f32.mxu0 0.0
  %941 = vmatmul.mubr.f32.gmra.mrb[0].mxu0 %v863
  %v942 = vpop.f32.mrb[0].mxu0
  %v943 = vadd.f32 0.0, %v942
  %v944 = vpop.f32.mrb[0].mxu0
  %945 = vmatprep.mubr.f32.mxu0 0.0
  %946 = vmatmul.mubr.f32.gmra.mrb[0].mxu0 %v866
  %v947 = vpop.f32.mrb[0].mxu0
  %v948 = vadd.f32 0.0, %v947
  %v949 = vpop.f32.mrb[0].mxu0
  %950 = vmatprep.mubr.f32.mxu0 0.0
  %951 = vmatmul.mubr.f32.gmra.mrb[0].mxu0 %v869
  %v952 = vpop.f32.mrb[0].mxu0
  %v953 = vadd.f32 0.0, %v952
  %v954 = vpop.f32.mrb[0].mxu0
  %955 = vdwg.mxu0
  %v956 = vsel %vm207, %v938, 0.0
  %v957 = vsel %vm207, %v943, 0.0
  %v958 = vadd.f32 %v956, %v957
  %v959 = vsel %vm207, %v948, 0.0
  %v960 = vadd.f32 %v958, %v959
  %v961 = vsel %vm207, %v953, 0.0
  %v962 = vadd.f32 %v960, %v961
  %v963 = vrot.slane %v962, 4
  %v964 = vadd.f32 %v962, %v963
  %v965 = vrot.slane %v964, 2
  %v966 = vadd.f32 %v964, %v965
  %v967 = vrot.slane %v966, 1
  %v968 = vadd.f32 %v966, %v967
  %v969 = vmul.f32 %v817, %v817
  %v970 = vmul.f32 %v820, %v820
  %v971 = vmul.f32 %v825, %v825
  %v972 = vmul.f32 %v828, %v828
  %v974 = vsel %vm207, %v969, 0
  %v977 = vsel %vm207, %v970, 0
  %v980 = vsel %vm207, %v971, 0
  %v983 = vsel %vm207, %v972, 0
  %985 = vmatprep.subr.mxu0 0.0
  %986 = vmatpush1.msra.mxu0 %v855
  %987 = vmatprep.subr.mxu0 0.0
  %988 = vmatpush1.msra.mxu0 %v856
  %989 = vmatprep.subr.mxu0 0.0
  %990 = vmatpush1.msra.mxu0 %v857
  %991 = vmatprep.subr.mxu0 0.0
  %992 = vmatpush1.msra.mxu0 %v858
  %993 = vmatprep.subr.mxu0 0.0
  %994 = vmatpush1.msra.mxu0 0.0
  %995 = vmatprep.subr.mxu0 0.0
  %996 = vmatpush1.msra.mxu0 0.0
  %997 = vmatprep.subr.mxu0 0.0
  %998 = vmatpush1.msra.mxu0 0.0
  %999 = vmatprep.subr.mxu0 0.0
  %1000 = vmatpush1.msra.mxu0 0.0
  %1001 = vmatprep.subr.mxu0 0.0
  %1002 = vmatpush1.msra.mxu0 0.0
  %1003 = vmatprep.subr.mxu0 0.0
  %1004 = vmatpush1.msra.mxu0 0.0
  %1005 = vmatprep.subr.mxu0 0.0
  %1006 = vmatpush1.msra.mxu0 0.0
  %1007 = vmatprep.subr.mxu0 0.0
  %1008 = vmatpush1.msra.mxu0 0.0
  %1009 = vmatprep.subr.mxu0 0.0
  %1010 = vmatpush1.msra.mxu0 0.0
  %1011 = vmatprep.subr.mxu0 0.0
  %1012 = vmatpush1.msra.mxu0 0.0
  %1013 = vmatprep.subr.mxu0 0.0
  %1014 = vmatpush1.msra.mxu0 0.0
  %1015 = vmatprep.subr.mxu0 0.0
  %1016 = vmatpush1.msra.mxu0 0.0
  %1017 = vmatprep.subr.mxu0 0.0
  %1018 = vmatpush1.msra.mxu0 0.0
  %1019 = vmatprep.subr.mxu0 0.0
  %1020 = vmatpush1.msra.mxu0 0.0
  %1021 = vmatprep.subr.mxu0 0.0
  %1022 = vmatpush1.msra.mxu0 0.0
  %1023 = vmatprep.subr.mxu0 0.0
  %1024 = vmatpush1.msra.mxu0 0.0
  %1025 = vmatprep.subr.mxu0 0.0
  %1026 = vmatpush1.msra.mxu0 0.0
  %1027 = vmatprep.subr.mxu0 0.0
  %1028 = vmatpush1.msra.mxu0 0.0
  %1029 = vmatprep.subr.mxu0 0.0
  %1030 = vmatpush1.msra.mxu0 0.0
  %1031 = vmatprep.subr.mxu0 0.0
  %1032 = vmatpush1.msra.mxu0 0.0
  %1033 = vmatprep.subr.mxu0 0.0
  %1034 = vmatpush1.msra.mxu0 0.0
  %1035 = vmatprep.subr.mxu0 0.0
  %1036 = vmatpush1.msra.mxu0 0.0
  %1037 = vmatprep.subr.mxu0 0.0
  %1038 = vmatpush1.msra.mxu0 0.0
  %1039 = vmatprep.subr.mxu0 0.0
  %1040 = vmatpush1.msra.mxu0 0.0
  %1041 = vmatprep.subr.mxu0 0.0
  %1042 = vmatpush1.msra.mxu0 0.0
  %1043 = vmatprep.subr.mxu0 0.0
  %1044 = vmatpush1.msra.mxu0 0.0
  %1045 = vmatprep.subr.mxu0 0.0
  %1046 = vmatpush1.msra.mxu0 0.0
  %1047 = vmatprep.subr.mxu0 0.0
  %1048 = vmatpush1.msra.mxu0 0.0
  %1049 = vmatprep.mubr.f32.mxu0 0.0
  %1050 = vmatmul.mubr.f32.gmra.mrb[0].mxu0 %v974
  %v1051 = vpop.f32.mrb[0].mxu0
  %v1052 = vadd.f32 0.0, %v1051
  %v1053 = vpop.f32.mrb[0].mxu0
  %1054 = vmatprep.mubr.f32.mxu0 0.0
  %1055 = vmatmul.mubr.f32.gmra.mrb[0].mxu0 %v977
  %v1056 = vpop.f32.mrb[0].mxu0
  %v1057 = vadd.f32 0.0, %v1056
  %v1058 = vpop.f32.mrb[0].mxu0
  %1059 = vmatprep.mubr.f32.mxu0 0.0
  %1060 = vmatmul.mubr.f32.gmra.mrb[0].mxu0 %v980
  %v1061 = vpop.f32.mrb[0].mxu0
  %v1062 = vadd.f32 0.0, %v1061
  %v1063 = vpop.f32.mrb[0].mxu0
  %1064 = vmatprep.mubr.f32.mxu0 0.0
  %1065 = vmatmul.mubr.f32.gmra.mrb[0].mxu0 %v983
  %v1066 = vpop.f32.mrb[0].mxu0
  %v1067 = vadd.f32 0.0, %v1066
  %v1068 = vpop.f32.mrb[0].mxu0
  %1069 = vdwg.mxu0
  %v1070 = vsel %vm207, %v1052, 0.0
  %v1071 = vsel %vm207, %v1057, 0.0
  %v1072 = vadd.f32 %v1070, %v1071
  %v1073 = vsel %vm207, %v1062, 0.0
  %v1074 = vadd.f32 %v1072, %v1073
  %v1075 = vsel %vm207, %v1067, 0.0
  %v1076 = vadd.f32 %v1074, %v1075
  %v1077 = vrot.slane %v1076, 4
  %v1078 = vadd.f32 %v1076, %v1077
  %v1079 = vrot.slane %v1078, 2
  %v1080 = vadd.f32 %v1078, %v1079
  %v1081 = vrot.slane %v1080, 1
  %v1082 = vadd.f32 %v1080, %v1081
  %v1083 = vmul.f32 %v968, 0.001953125
  %v1084 = vmul.f32 %v1082, 0.001953125
  %v1085 = vmul.f32 %v1083, %v1083
  %v1086 = vsub.f32 %v1084, %v1085
  %v1087 = vsub.f32 %v817, %v1083
  %v1088 = vsub.f32 %v820, %v1083
  %v1089 = vsub.f32 %v825, %v1083
  %v1090 = vsub.f32 %v828, %v1083
  %v1091 = vadd.f32 %v1086, 1e-05
  %v1092 = vrsqrt.pop %v1091
  %v1093 = vmul.f32 %v1087, %v1092
  %v1094 = vmul.f32 %v1088, %v1092
  %v1095 = vmul.f32 %v1089, %v1092
  %v1096 = vmul.f32 %v1090, %v1092
  %v1097 = vmul.f32 %v1093, %v847
  %v1098 = vmul.f32 %v1094, %v848
  %v1099 = vmul.f32 %v1095, %v849
  %v1100 = vmul.f32 %v1096, %v850
  %v1101 = vadd.f32 %v1097, %v851
  %v1102 = vadd.f32 %v1098, %v852
  %v1103 = vadd.f32 %v1099, %v853
  %v1104 = vadd.f32 %v1100, %v854
  %v1106 = vsel %vm207, %v833, 0
  %v1109 = vsel %vm207, %v836, 0
  %v1112 = vsel %vm207, %v841, 0
  %v1115 = vsel %vm207, %v844, 0
  %1117 = vmatprep.subr.mxu0 0.0
  %1118 = vmatpush1.msra.mxu0 %v855
  %1119 = vmatprep.subr.mxu0 0.0
  %1120 = vmatpush1.msra.mxu0 %v856
  %1121 = vmatprep.subr.mxu0 0.0
  %1122 = vmatpush1.msra.mxu0 %v857
  %1123 = vmatprep.subr.mxu0 0.0
  %1124 = vmatpush1.msra.mxu0 %v858
  %1125 = vmatprep.subr.mxu0 0.0
  %1126 = vmatpush1.msra.mxu0 0.0
  %1127 = vmatprep.subr.mxu0 0.0
  %1128 = vmatpush1.msra.mxu0 0.0
  %1129 = vmatprep.subr.mxu0 0.0
  %1130 = vmatpush1.msra.mxu0 0.0
  %1131 = vmatprep.subr.mxu0 0.0
  %1132 = vmatpush1.msra.mxu0 0.0
  %1133 = vmatprep.subr.mxu0 0.0
  %1134 = vmatpush1.msra.mxu0 0.0
  %1135 = vmatprep.subr.mxu0 0.0
  %1136 = vmatpush1.msra.mxu0 0.0
  %1137 = vmatprep.subr.mxu0 0.0
  %1138 = vmatpush1.msra.mxu0 0.0
  %1139 = vmatprep.subr.mxu0 0.0
  %1140 = vmatpush1.msra.mxu0 0.0
  %1141 = vmatprep.subr.mxu0 0.0
  %1142 = vmatpush1.msra.mxu0 0.0
  %1143 = vmatprep.subr.mxu0 0.0
  %1144 = vmatpush1.msra.mxu0 0.0
  %1145 = vmatprep.subr.mxu0 0.0
  %1146 = vmatpush1.msra.mxu0 0.0
  %1147 = vmatprep.subr.mxu0 0.0
  %1148 = vmatpush1.msra.mxu0 0.0
  %1149 = vmatprep.subr.mxu0 0.0
  %1150 = vmatpush1.msra.mxu0 0.0
  %1151 = vmatprep.subr.mxu0 0.0
  %1152 = vmatpush1.msra.mxu0 0.0
  %1153 = vmatprep.subr.mxu0 0.0
  %1154 = vmatpush1.msra.mxu0 0.0
  %1155 = vmatprep.subr.mxu0 0.0
  %1156 = vmatpush1.msra.mxu0 0.0
  %1157 = vmatprep.subr.mxu0 0.0
  %1158 = vmatpush1.msra.mxu0 0.0
  %1159 = vmatprep.subr.mxu0 0.0
  %1160 = vmatpush1.msra.mxu0 0.0
  %1161 = vmatprep.subr.mxu0 0.0
  %1162 = vmatpush1.msra.mxu0 0.0
  %1163 = vmatprep.subr.mxu0 0.0
  %1164 = vmatpush1.msra.mxu0 0.0
  %1165 = vmatprep.subr.mxu0 0.0
  %1166 = vmatpush1.msra.mxu0 0.0
  %1167 = vmatprep.subr.mxu0 0.0
  %1168 = vmatpush1.msra.mxu0 0.0
  %1169 = vmatprep.subr.mxu0 0.0
  %1170 = vmatpush1.msra.mxu0 0.0
  %1171 = vmatprep.subr.mxu0 0.0
  %1172 = vmatpush1.msra.mxu0 0.0
  %1173 = vmatprep.subr.mxu0 0.0
  %1174 = vmatpush1.msra.mxu0 0.0
  %1175 = vmatprep.subr.mxu0 0.0
  %1176 = vmatpush1.msra.mxu0 0.0
  %1177 = vmatprep.subr.mxu0 0.0
  %1178 = vmatpush1.msra.mxu0 0.0
  %1179 = vmatprep.subr.mxu0 0.0
  %1180 = vmatpush1.msra.mxu0 0.0
  %1181 = vmatprep.mubr.f32.mxu0 0.0
  %1182 = vmatmul.mubr.f32.gmra.mrb[0].mxu0 %v1106
  %v1183 = vpop.f32.mrb[0].mxu0
  %v1184 = vadd.f32 0.0, %v1183
  %v1185 = vpop.f32.mrb[0].mxu0
  %1186 = vmatprep.mubr.f32.mxu0 0.0
  %1187 = vmatmul.mubr.f32.gmra.mrb[0].mxu0 %v1109
  %v1188 = vpop.f32.mrb[0].mxu0
  %v1189 = vadd.f32 0.0, %v1188
  %v1190 = vpop.f32.mrb[0].mxu0
  %1191 = vmatprep.mubr.f32.mxu0 0.0
  %1192 = vmatmul.mubr.f32.gmra.mrb[0].mxu0 %v1112
  %v1193 = vpop.f32.mrb[0].mxu0
  %v1194 = vadd.f32 0.0, %v1193
  %v1195 = vpop.f32.mrb[0].mxu0
  %1196 = vmatprep.mubr.f32.mxu0 0.0
  %1197 = vmatmul.mubr.f32.gmra.mrb[0].mxu0 %v1115
  %v1198 = vpop.f32.mrb[0].mxu0
  %v1199 = vadd.f32 0.0, %v1198
  %v1200 = vpop.f32.mrb[0].mxu0
  %1201 = vdwg.mxu0
  %v1202 = vsel %vm207, %v1184, 0.0
  %v1203 = vsel %vm207, %v1189, 0.0
  %v1204 = vadd.f32 %v1202, %v1203
  %v1205 = vsel %vm207, %v1194, 0.0
  %v1206 = vadd.f32 %v1204, %v1205
  %v1207 = vsel %vm207, %v1199, 0.0
  %v1208 = vadd.f32 %v1206, %v1207
  %v1209 = vrot.slane %v1208, 4
  %v1210 = vadd.f32 %v1208, %v1209
  %v1211 = vrot.slane %v1210, 2
  %v1212 = vadd.f32 %v1210, %v1211
  %v1213 = vrot.slane %v1212, 1
  %v1214 = vadd.f32 %v1212, %v1213
  %v1215 = vmul.f32 %v833, %v833
  %v1216 = vmul.f32 %v836, %v836
  %v1217 = vmul.f32 %v841, %v841
  %v1218 = vmul.f32 %v844, %v844
  %v1220 = vsel %vm207, %v1215, 0
  %v1223 = vsel %vm207, %v1216, 0
  %v1226 = vsel %vm207, %v1217, 0
  %v1229 = vsel %vm207, %v1218, 0
  %1231 = vmatprep.subr.mxu0 0.0
  %1232 = vmatpush1.msra.mxu0 %v855
  %1233 = vmatprep.subr.mxu0 0.0
  %1234 = vmatpush1.msra.mxu0 %v856
  %1235 = vmatprep.subr.mxu0 0.0
  %1236 = vmatpush1.msra.mxu0 %v857
  %1237 = vmatprep.subr.mxu0 0.0
  %1238 = vmatpush1.msra.mxu0 %v858
  %1239 = vmatprep.subr.mxu0 0.0
  %1240 = vmatpush1.msra.mxu0 0.0
  %1241 = vmatprep.subr.mxu0 0.0
  %1242 = vmatpush1.msra.mxu0 0.0
  %1243 = vmatprep.subr.mxu0 0.0
  %1244 = vmatpush1.msra.mxu0 0.0
  %1245 = vmatprep.subr.mxu0 0.0
  %1246 = vmatpush1.msra.mxu0 0.0
  %1247 = vmatprep.subr.mxu0 0.0
  %1248 = vmatpush1.msra.mxu0 0.0
  %1249 = vmatprep.subr.mxu0 0.0
  %1250 = vmatpush1.msra.mxu0 0.0
  %1251 = vmatprep.subr.mxu0 0.0
  %1252 = vmatpush1.msra.mxu0 0.0
  %1253 = vmatprep.subr.mxu0 0.0
  %1254 = vmatpush1.msra.mxu0 0.0
  %1255 = vmatprep.subr.mxu0 0.0
  %1256 = vmatpush1.msra.mxu0 0.0
  %1257 = vmatprep.subr.mxu0 0.0
  %1258 = vmatpush1.msra.mxu0 0.0
  %1259 = vmatprep.subr.mxu0 0.0
  %1260 = vmatpush1.msra.mxu0 0.0
  %1261 = vmatprep.subr.mxu0 0.0
  %1262 = vmatpush1.msra.mxu0 0.0
  %1263 = vmatprep.subr.mxu0 0.0
  %1264 = vmatpush1.msra.mxu0 0.0
  %1265 = vmatprep.subr.mxu0 0.0
  %1266 = vmatpush1.msra.mxu0 0.0
  %1267 = vmatprep.subr.mxu0 0.0
  %1268 = vmatpush1.msra.mxu0 0.0
  %1269 = vmatprep.subr.mxu0 0.0
  %1270 = vmatpush1.msra.mxu0 0.0
  %1271 = vmatprep.subr.mxu0 0.0
  %1272 = vmatpush1.msra.mxu0 0.0
  %1273 = vmatprep.subr.mxu0 0.0
  %1274 = vmatpush1.msra.mxu0 0.0
  %1275 = vmatprep.subr.mxu0 0.0
  %1276 = vmatpush1.msra.mxu0 0.0
  %1277 = vmatprep.subr.mxu0 0.0
  %1278 = vmatpush1.msra.mxu0 0.0
  %1279 = vmatprep.subr.mxu0 0.0
  %1280 = vmatpush1.msra.mxu0 0.0
  %1281 = vmatprep.subr.mxu0 0.0
  %1282 = vmatpush1.msra.mxu0 0.0
  %1283 = vmatprep.subr.mxu0 0.0
  %1284 = vmatpush1.msra.mxu0 0.0
  %1285 = vmatprep.subr.mxu0 0.0
  %1286 = vmatpush1.msra.mxu0 0.0
  %1287 = vmatprep.subr.mxu0 0.0
  %1288 = vmatpush1.msra.mxu0 0.0
  %1289 = vmatprep.subr.mxu0 0.0
  %1290 = vmatpush1.msra.mxu0 0.0
  %1291 = vmatprep.subr.mxu0 0.0
  %1292 = vmatpush1.msra.mxu0 0.0
  %1293 = vmatprep.subr.mxu0 0.0
  %1294 = vmatpush1.msra.mxu0 0.0
  %1295 = vmatprep.mubr.f32.mxu0 0.0
  %1296 = vmatmul.mubr.f32.gmra.mrb[0].mxu0 %v1220
  %v1297 = vpop.f32.mrb[0].mxu0
  %v1298 = vadd.f32 0.0, %v1297
  %v1299 = vpop.f32.mrb[0].mxu0
  %1300 = vmatprep.mubr.f32.mxu0 0.0
  %1301 = vmatmul.mubr.f32.gmra.mrb[0].mxu0 %v1223
  %v1302 = vpop.f32.mrb[0].mxu0
  %v1303 = vadd.f32 0.0, %v1302
  %v1304 = vpop.f32.mrb[0].mxu0
  %1305 = vmatprep.mubr.f32.mxu0 0.0
  %1306 = vmatmul.mubr.f32.gmra.mrb[0].mxu0 %v1226
  %v1307 = vpop.f32.mrb[0].mxu0
  %v1308 = vadd.f32 0.0, %v1307
  %v1309 = vpop.f32.mrb[0].mxu0
  %1310 = vmatprep.mubr.f32.mxu0 0.0
  %1311 = vmatmul.mubr.f32.gmra.mrb[0].mxu0 %v1229
  %v1312 = vpop.f32.mrb[0].mxu0
  %v1313 = vadd.f32 0.0, %v1312
  %v1314 = vpop.f32.mrb[0].mxu0
  %1315 = vdwg.mxu0
  %v1316 = vsel %vm207, %v1298, 0.0
  %v1317 = vsel %vm207, %v1303, 0.0
  %v1318 = vadd.f32 %v1316, %v1317
  %v1319 = vsel %vm207, %v1308, 0.0
  %v1320 = vadd.f32 %v1318, %v1319
  %v1321 = vsel %vm207, %v1313, 0.0
  %v1322 = vadd.f32 %v1320, %v1321
  %v1323 = vrot.slane %v1322, 4
  %v1324 = vadd.f32 %v1322, %v1323
  %v1325 = vrot.slane %v1324, 2
  %v1326 = vadd.f32 %v1324, %v1325
  %v1327 = vrot.slane %v1326, 1
  %v1328 = vadd.f32 %v1326, %v1327
  %v1329 = vmul.f32 %v1214, 0.001953125
  %v1330 = vmul.f32 %v1328, 0.001953125
  %v1331 = vmul.f32 %v1329, %v1329
  %v1332 = vsub.f32 %v1330, %v1331
  %v1333 = vsub.f32 %v833, %v1329
  %v1334 = vsub.f32 %v836, %v1329
  %v1335 = vsub.f32 %v841, %v1329
  %v1336 = vsub.f32 %v844, %v1329
  %v1337 = vadd.f32 %v1332, 1e-05
  %v1338 = vrsqrt.pop %v1337
  %v1339 = vmul.f32 %v1333, %v1338
  %v1340 = vmul.f32 %v1334, %v1338
  %v1341 = vmul.f32 %v1335, %v1338
  %v1342 = vmul.f32 %v1336, %v1338
  %v1343 = vmul.f32 %v1339, %v847
  %v1344 = vmul.f32 %v1340, %v848
  %v1345 = vmul.f32 %v1341, %v849
  %v1346 = vmul.f32 %v1342, %v850
  %v1347 = vadd.f32 %v1343, %v851
  %v1348 = vadd.f32 %v1344, %v852
  %v1349 = vadd.f32 %v1345, %v853
  %v1350 = vadd.f32 %v1346, %v854
  %v1351 = vmul.f32 %v1347, 0.5
  %v1352 = vmul.f32 %v1348, 0.5
  %v1353 = vmul.f32 %v1349, 0.5
  %v1354 = vmul.f32 %v1350, 0.5
  %v1355 = vmul.f32 %v1347, 0.70710677
  %v1356 = vmul.f32 %v1348, 0.70710677
  %v1357 = vmul.f32 %v1349, 0.70710677
  %v1358 = vmul.f32 %v1350, 0.70710677
  %v1359 = verf.f32.pop %v1355
  %v1360 = verf.f32.pop %v1356
  %v1361 = verf.f32.pop %v1357
  %v1362 = verf.f32.pop %v1358
  %v1363 = vadd.f32 %v1359, 1.0
  %v1364 = vadd.f32 %v1360, 1.0
  %v1365 = vadd.f32 %v1361, 1.0
  %v1366 = vadd.f32 %v1362, 1.0
  %v1367 = vmul.f32 %v1351, %v1363
  %v1368 = vmul.f32 %v1352, %v1364
  %v1369 = vmul.f32 %v1353, %v1365
  %v1370 = vmul.f32 %v1354, %v1366
  %v1371 = vld [vmem:[%s1] sm:$0xff]
  %v1372 = vld [vmem:[%s1 + $0x8] sm:$0xff]
  %v1373 = vld [vmem:[%s1 + $0x10] sm:$0xff]
  %v1374 = vld [vmem:[%s1 + $0x18] sm:$0xff]
  %v1375 = vsub.f32 %v1371, %v1101
  %v1376 = vsub.f32 %v1372, %v1102
  %v1377 = vsub.f32 %v1373, %v1103
  %v1378 = vsub.f32 %v1374, %v1104
  %v1379 = vmul.f32 %v1367, %v1375
  %v1380 = vmul.f32 %v1368, %v1376
  %v1381 = vmul.f32 %v1369, %v1377
  %v1382 = vmul.f32 %v1370, %v1378
  %v1383 = vadd.f32 %v1379, %v1101
  %v1384 = vadd.f32 %v1380, %v1102
  %v1385 = vadd.f32 %v1381, %v1103
  %v1386 = vadd.f32 %v1382, %v1104
  %vm1387 = vcmp.gt.f32.partialorder %v1383, 0.0
  %vm1388 = vcmp.gt.f32.partialorder %v1384, 0.0
  %vm1389 = vcmp.gt.f32.partialorder %v1385, 0.0
  %vm1390 = vcmp.gt.f32.partialorder %v1386, 0.0
  %v1391 = vmul.f32 %v1383, 1.442695
  %v1392 = vpow.pop %v1391
  %v1393 = vmul.f32 %v1384, 1.442695
  %v1394 = vpow.pop %v1393
  %v1395 = vmul.f32 %v1385, 1.442695
  %v1396 = vpow.pop %v1395
  %v1397 = vmul.f32 %v1386, 1.442695
  %v1398 = vpow.pop %v1397
  %v1399 = vsub.f32 %v1392, 1.0
  %v1400 = vsub.f32 %v1394, 1.0
  %v1401 = vsub.f32 %v1396, 1.0
  %v1402 = vsub.f32 %v1398, 1.0
  %v1403 = vsel %vm1387, %v1383, %v1399
  %v1404 = vsel %vm1388, %v1384, %v1400
  %v1405 = vsel %vm1389, %v1385, %v1401
  %v1406 = vsel %vm1390, %v1386, %v1402
  %v1407 = vsub.f32 %v1403, %v384
  %v1408 = vsub.f32 %v1404, %v385
  %v1409 = vsub.f32 %v1405, %v386
  %v1410 = vsub.f32 %v1406, %v387
  %v1411 = vmul.f32 %v1367, %v1407
  %v1412 = vmul.f32 %v1368, %v1408
  %v1413 = vmul.f32 %v1369, %v1409
  %v1414 = vmul.f32 %v1370, %v1410
  %v1415 = vadd.f32 %v1411, %v384
  %v1416 = vadd.f32 %v1412, %v385
  %v1417 = vadd.f32 %v1413, %v386
  %v1418 = vadd.f32 %v1414, %v387
  %1419 = vst.msk [vmem:[%s16] sm:$0xff] %vm207, %v1415
  %1420 = vst.msk [vmem:[%s16 + $0x8] sm:$0xff] %vm207, %v1416
  %1421 = vst.msk [vmem:[%s16 + $0x10] sm:$0xff] %vm207, %v1417
  %1422 = vst.msk [vmem:[%s16 + $0x18] sm:$0xff] %vm207, %v1418
  %1423 = vst.msk [vmem:[%s17] sm:$0xff] %vm207, %v1383
  %1424 = vst.msk [vmem:[%s17 + $0x8] sm:$0xff] %vm207, %v1384
  %1425 = vst.msk [vmem:[%s17 + $0x10] sm:$0xff] %vm207, %v1385
  %1426 = vst.msk [vmem:[%s17 + $0x18] sm:$0xff] %vm207, %v1386
  // Predicated region
  $region66: #{prelayer_forward.1} parent=0 // pred_check
    _
  $region67: #{prelayer_forward.1} parent=0 // pred_check_branch
    %1428 = sbr.rel (0) target = $region69
  $region68: #{prelayer_forward.1} parent=0 // pred_region
    _
  $region69: #{prelayer_forward.1} parent=0 // pred_fallthru
    _
  // Predicated region
  $region70: #{prelayer_forward.1} parent=0 // pred_check
    _
  $region71: #{prelayer_forward.1} parent=0 // pred_check_branch
    %1430 = sbr.rel (0) target = $region73
  $region72: #{prelayer_forward.1} parent=0 // pred_region
    _
  $region73: #{prelayer_forward.1} parent=0 // pred_fallthru
    _
  // Predicated region
  $region74: #{prelayer_forward.1} parent=0 // pred_check
    _
  $region75: #{prelayer_forward.1} parent=0 // pred_check_branch
    %1432 = sbr.rel (0) target = $region77
  $region76: #{prelayer_forward.1} parent=0 // pred_region
    _
  $region77: #{prelayer_forward.1} parent=0 // pred_fallthru
    _
  // Predicated region
  $region78: #{prelayer_forward.1} parent=0 // pred_check
    _
  $region79: #{prelayer_forward.1} parent=0 // pred_check_branch
    %1434 = sbr.rel (0) target = $region81
  $region80: #{prelayer_forward.1} parent=0 // pred_region
    _
  $region81: #{prelayer_forward.1} parent=0 // pred_fallthru
    _

</llo_original>
